<compile_context>
chip_gen: v6e
topology: v6e:2x2x1
jax: 0.10.0
libtpu: 0.0.40
codegen_flags: <defaults>
</compile_context>

<pallas_src>
import functools

import jax
import jax.numpy as jnp
from jax.experimental import pallas as pl
from jax.experimental.pallas import tpu as pltpu


def _round_up(x, m):
    return ((x + m - 1) // m) * m


def _pad2d(m, rows, cols, dtype):
    r, c = m.shape
    return jnp.zeros((rows, cols), dtype).at[:r, :c].set(m.astype(dtype))


def _pad_row(v, cols, dtype=jnp.float32):
    return jnp.zeros((1, cols), dtype).at[0, :v.shape[0]].set(v.astype(dtype))


# ----------------------------------------------------------------------------
# Kernel 1: WeightedSAGEConv(in, hidden) + bias + eval-BatchNorm + ReLU, fused.
# ----------------------------------------------------------------------------

def _sage_bn_relu_kernel(a_ref, xk_ref, xr_ref, wlT_ref, wrT_ref,
                         scale_ref, shift_ref, o_ref, acc_ref):
    k = pl.program_id(1)

    @pl.when(k == 0)
    def _():
        acc_ref[...] = jnp.zeros_like(acc_ref)

    # (tm, tk) @ (tk, Fp), bf16 operands, f32 accumulation of the agg tile.
    acc_ref[...] += jnp.dot(a_ref[...], xk_ref[...],
                            preferred_element_type=jnp.float32)

    @pl.when(k == pl.num_programs(1) - 1)
    def _():
        agg = acc_ref[...].astype(jnp.bfloat16)
        out = jnp.dot(agg, wlT_ref[...], preferred_element_type=jnp.float32)
        out = out + jnp.dot(xr_ref[...], wrT_ref[...],
                            preferred_element_type=jnp.float32)
        # bias + eval-mode BatchNorm folded into (scale, shift), then ReLU.
        out = out * scale_ref[...] + shift_ref[...]
        o_ref[...] = jnp.maximum(out, 0.0).astype(o_ref.dtype)


def sage_conv_bn_relu(A, x, wlT, wrT, scale, shift, *, tm, tk):
    Np = A.shape[0]
    Fp = x.shape[1]
    Cp = wlT.shape[1]
    grid = (Np // tm, Np // tk)
    return pl.pallas_call(
        _sage_bn_relu_kernel,
        out_shape=jax.ShapeDtypeStruct((Np, Cp), jnp.bfloat16),
        grid_spec=pltpu.PrefetchScalarGridSpec(
            num_scalar_prefetch=0,
            grid=grid,
            in_specs=[
                pl.BlockSpec((tm, tk), lambda i, k: (i, k)),   # A tile
                pl.BlockSpec((tk, Fp), lambda i, k: (k, 0)),   # X (aggregation)
                pl.BlockSpec((tm, Fp), lambda i, k: (i, 0)),   # X (root path)
                pl.BlockSpec((Fp, Cp), lambda i, k: (0, 0)),   # Wl^T (resident)
                pl.BlockSpec((Fp, Cp), lambda i, k: (0, 0)),   # Wr^T (resident)
                pl.BlockSpec((1, Cp), lambda i, k: (0, 0)),    # BN scale (resident)
                pl.BlockSpec((1, Cp), lambda i, k: (0, 0)),    # BN shift+bias (resident)
            ],
            out_specs=pl.BlockSpec((tm, Cp), lambda i, k: (i, 0)),
            scratch_shapes=[pltpu.VMEM((tm, Fp), jnp.float32)],
        ),
        compiler_params=pltpu.CompilerParams(
            dimension_semantics=("parallel", "arbitrary")),
    )(A, x, x, wlT, wrT, scale, shift)


# ----------------------------------------------------------------------------
# Kernel 2: WeightedSAGEConv(hidden, out) + bias + log_softmax + var partials.
# ----------------------------------------------------------------------------

def _sage_logsoftmax_var_kernel(a_ref, xk_ref, xr_ref, wlT_ref, wrT_ref, b_ref,
                                ls_ref, stats_ref, acc_ref,
                                *, n_rows, n_cols, tile_m):
    i = pl.program_id(0)
    k = pl.program_id(1)

    @pl.when(k == 0)
    def _():
        acc_ref[...] = jnp.zeros_like(acc_ref)

    acc_ref[...] += jnp.dot(a_ref[...], xk_ref[...],
                            preferred_element_type=jnp.float32)

    @pl.when(k == pl.num_programs(1) - 1)
    def _():
        agg = acc_ref[...].astype(jnp.bfloat16)
        logits = jnp.dot(agg, wlT_ref[...], preferred_element_type=jnp.float32)
        logits = logits + jnp.dot(xr_ref[...], wrT_ref[...],
                                  preferred_element_type=jnp.float32)
        logits = logits + b_ref[...]

        tm, cp = logits.shape
        col = jax.lax.broadcasted_iota(jnp.int32, (tm, cp), 1)
        row = jax.lax.broadcasted_iota(jnp.int32, (tm, cp), 0) + i * tile_m
        col_ok = col < n_cols
        row_ok = row < n_rows

        # log_softmax over the real (unpadded) class columns.
        masked = jnp.where(col_ok, logits, jnp.float32(-1e30))
        m = jnp.max(masked, axis=-1, keepdims=True)
        z = masked - m
        lse = jnp.log(jnp.sum(jnp.exp(z), axis=-1, keepdims=True))
        ls_ref[...] = (z - lse).astype(ls_ref.dtype)

        # Partial (sum, sum of squares) of the real logits for torch.var(out).
        v = jnp.where(col_ok & row_ok, logits, 0.0)
        s = jnp.sum(v)
        sq = jnp.sum(v * v)
        rr = jax.lax.broadcasted_iota(jnp.int32, stats_ref.shape, 0)
        ll = jax.lax.broadcasted_iota(jnp.int32, stats_ref.shape, 1)
        stats_ref[...] = jnp.where((rr == 0) & (ll == 0), s,
                                   jnp.where((rr == 0) & (ll == 1), sq, 0.0))


def sage_conv_logsoftmax_var(A, h, wlT, wrT, bias, *, tm, tk, n_rows, n_cols):
    Np = A.shape[0]
    Fp = h.shape[1]
    Cp = wlT.shape[1]
    grid = (Np // tm, Np // tk)
    kernel = functools.partial(_sage_logsoftmax_var_kernel,
                               n_rows=n_rows, n_cols=n_cols, tile_m=tm)
    return pl.pallas_call(
        kernel,
        out_shape=(jax.ShapeDtypeStruct((Np, Cp), jnp.float32),
                   jax.ShapeDtypeStruct((grid[0] * 8, 128), jnp.float32)),
        grid_spec=pltpu.PrefetchScalarGridSpec(
            num_scalar_prefetch=0,
            grid=grid,
            in_specs=[
                pl.BlockSpec((tm, tk), lambda i, k: (i, k)),   # A tile
                pl.BlockSpec((tk, Fp), lambda i, k: (k, 0)),   # h (aggregation)
                pl.BlockSpec((tm, Fp), lambda i, k: (i, 0)),   # h (root path)
                pl.BlockSpec((Fp, Cp), lambda i, k: (0, 0)),   # Wl^T (resident)
                pl.BlockSpec((Fp, Cp), lambda i, k: (0, 0)),   # Wr^T (resident)
                pl.BlockSpec((1, Cp), lambda i, k: (0, 0)),    # bias (resident)
            ],
            out_specs=(pl.BlockSpec((tm, Cp), lambda i, k: (i, 0)),
                       pl.BlockSpec((8, 128), lambda i, k: (i, 0))),
            scratch_shapes=[pltpu.VMEM((tm, Fp), jnp.float32)],
        ),
        compiler_params=pltpu.CompilerParams(
            dimension_semantics=("parallel", "arbitrary")),
    )(A, h, h, wlT, wrT, bias)


# ----------------------------------------------------------------------------
# Plain-JAX glue: edge-weight min/max normalization + dense adjacency build.
# ----------------------------------------------------------------------------

def build_norm_adj(edge_index, edge_weight, padded_nodes):
    """Dense mean-aggregation operator (padded rows/cols stay all-zero)."""
    src = edge_index[0]
    dst = edge_index[1]
    w = edge_weight.astype(jnp.float32)
    wmin = jnp.min(w)
    wmax = jnp.max(w)
    w_norm = jnp.where(wmax == wmin, jnp.ones_like(w), (w - wmin) / (wmax - wmin))
    A = jnp.zeros((padded_nodes, padded_nodes), jnp.float32).at[dst, src].add(w_norm)
    deg = jnp.zeros((padded_nodes,), jnp.float32).at[dst].add(1.0)
    return A / jnp.maximum(deg, 1.0)[:, None]   # 0 rows for isolated nodes


# ----------------------------------------------------------------------------
# SAGEWEIGHT model (n_layers=2): conv -> BN -> ReLU -> (dropout) -> conv
# ----------------------------------------------------------------------------

def init_params(key, in_channels, hidden_channels, out_channels):
    ks = jax.random.split(key, 6)

    def lin(k, fan_out, fan_in):
        bound = 1.0 / jnp.sqrt(jnp.float32(fan_in))
        return jax.random.uniform(k, (fan_out, fan_in), jnp.float32, -bound, bound)

    return {
        "w_l1": lin(ks[0], hidden_channels, in_channels),
        "b_l1": jax.random.uniform(ks[1], (hidden_channels,), jnp.float32, -0.1, 0.1),
        "w_r1": lin(ks[2], hidden_channels, in_channels),
        "bn_gamma": jnp.ones((hidden_channels,), jnp.float32),
        "bn_beta": jnp.zeros((hidden_channels,), jnp.float32),
        "bn_mean": jnp.zeros((hidden_channels,), jnp.float32),
        "bn_var": jnp.ones((hidden_channels,), jnp.float32),
        "w_l2": lin(ks[3], out_channels, hidden_channels),
        "b_l2": jax.random.uniform(ks[4], (out_channels,), jnp.float32, -0.1, 0.1),
        "w_r2": lin(ks[5], out_channels, hidden_channels),
    }


@jax.jit
def sageweight_forward(params, x, edge_index, edge_weight):
    N, Fin = x.shape
    H = params["w_l1"].shape[0]
    C = params["w_l2"].shape[0]

    # Tiling: pad node count so one tile size divides it; pad all lane dims
    # to multiples of 128 for lane-dense MXU operands and unmasked stores.
    tm = min(512, _round_up(N, 128))
    tk = tm
    Np = _round_up(N, tm)
    Fp = _round_up(Fin, 128)
    Hp = _round_up(H, 128)
    Cp = _round_up(C, 128)

    # Dense mean-aggregation operator (scatter glue, not the hot path).
    # TODO(synk): for large sparse graphs replace dense A@X with a
    # scalar-prefetch CSR gather formulation instead of O(N^2) work.
    A = build_norm_adj(edge_index, edge_weight, Np).astype(jnp.bfloat16)
    xp = _pad2d(x, Np, Fp, jnp.bfloat16)

    # ---- layer 1: WeightedSAGEConv(in, hidden) + BN(eval) + ReLU (+dropout id)
    wl1T = _pad2d(params["w_l1"].T, Fp, Hp, jnp.bfloat16)
    wr1T = _pad2d(params["w_r1"].T, Fp, Hp, jnp.bfloat16)
    inv = jax.lax.rsqrt(params["bn_var"] + 1e-5)
    scale = params["bn_gamma"] * inv
    shift = params["bn_beta"] - params["bn_mean"] * scale + params["b_l1"] * scale
    h = sage_conv_bn_relu(A, xp, wl1T, wr1T,
                          _pad_row(scale, Hp), _pad_row(shift, Hp),
                          tm=tm, tk=tk)
    # TODO(synk): training-mode dropout(p=0.5) / batch-stat BN intentionally
    # replaced by deterministic eval-mode semantics.

    # ---- layer 2: WeightedSAGEConv(hidden, out) + log_softmax + var partials
    wl2T = _pad2d(params["w_l2"].T, Hp, Cp, jnp.bfloat16)
    wr2T = _pad2d(params["w_r2"].T, Hp, Cp, jnp.bfloat16)
    b2 = _pad_row(params["b_l2"], Cp)
    ls_p, stats = sage_conv_logsoftmax_var(A, h, wl2T, wr2T, b2,
                                           tm=tm, tk=tk, n_rows=N, n_cols=C)

    log_probs = ls_p[:N, :C]
    n = N * C
    total = jnp.sum(stats[:, 0])
    total_sq = jnp.sum(stats[:, 1])
    var = (total_sq - total * total / n) / (n - 1)   # unbiased, all elements
    return log_probs, var


if __name__ == "__main__":
    key = jax.random.PRNGKey(0)
    k_x, k_ei, k_ew, k_p = jax.random.split(key, 4)

    N, E = 16, 48
    in_channels, hidden_channels, out_channels = 8, 32, 8

    x = jax.random.normal(k_x, (N, in_channels), jnp.float32)
    edge_index = jax.random.randint(k_ei, (2, E), 0, N, dtype=jnp.int32)
    edge_weight = jax.random.uniform(k_ew, (E,), jnp.float32, 0.1, 2.0)

    params = init_params(k_p, in_channels, hidden_channels, out_channels)

    log_probs, var = sageweight_forward(params, x, edge_index, edge_weight)
    jax.block_until_ready((log_probs, var))

    assert log_probs.shape == (N, out_channels)
    assert jnp.isfinite(log_probs).all() and jnp.isfinite(var)
    # log_softmax rows must exponentiate-sum to 1.
    row_sums = jnp.sum(jnp.exp(log_probs), axis=-1)
    assert jnp.allclose(row_sums, 1.0, atol=2e-3)
    print("KERNEL_OK")
</pallas_src>

<mosaic_0001>
module attributes {stable_mosaic.version = 11 : i64} {
  func.func private @main(%arg0: i32) attributes {dimension_semantics = [#tpu.dimension_semantics<core_parallel>], iteration_bounds = array<i64: 2>, tpu.core_type = #tpu.core_type<sc_scalar_subcore>, window_params = []} {
    return
  }
}

module attributes {stable_mosaic.version = 11 : i64} {
  func.func private @main(%arg0: i32) attributes {dimension_semantics = [#tpu.dimension_semantics<core_parallel>], iteration_bounds = array<i64: 2>, tpu.core_type = #tpu.core_type<sc_scalar_subcore>, window_params = []} {
    return
  }
}

module attributes {stable_mosaic.version = 11 : i64} {
  func.func @_sage_bn_relu_kernel(%arg0: i32, %arg1: i32, %arg2: memref<128x128xbf16, #tpu.memory_space<vmem>>, %arg3: memref<128x128xbf16, #tpu.memory_space<vmem>>, %arg4: memref<128x128xbf16, #tpu.memory_space<vmem>>, %arg5: memref<128x128xbf16, #tpu.memory_space<vmem>>, %arg6: memref<128x128xbf16, #tpu.memory_space<vmem>>, %arg7: memref<1x128xf32, #tpu.memory_space<vmem>>, %arg8: memref<1x128xf32, #tpu.memory_space<vmem>>, %arg9: memref<128x128xbf16, #tpu.memory_space<vmem>>, %arg10: memref<128x128xf32, #tpu.memory_space<vmem>>) attributes {dimension_semantics = [#tpu.dimension_semantics<parallel>, #tpu.dimension_semantics<arbitrary>], iteration_bounds = array<i64: 1, 1>, scalar_prefetch = 0 : i64, scratch_operands = 1 : i64, tpu.core_type = #tpu.core_type<tc>, window_params = [{transform_indices = @transform_0, window_bounds = array<i64: 128, 128>}, {transform_indices = @transform_1, window_bounds = array<i64: 128, 128>}, {transform_indices = @transform_2, window_bounds = array<i64: 128, 128>}, {pipeline_mode = #tpu.pipeline_mode<synchronous>, transform_indices = @transform_3, window_bounds = array<i64: 128, 128>}, {pipeline_mode = #tpu.pipeline_mode<synchronous>, transform_indices = @transform_4, window_bounds = array<i64: 128, 128>}, {pipeline_mode = #tpu.pipeline_mode<synchronous>, transform_indices = @transform_5, window_bounds = array<i64: 1, 128>}, {pipeline_mode = #tpu.pipeline_mode<synchronous>, transform_indices = @transform_6, window_bounds = array<i64: 1, 128>}, {transform_indices = @transform_7, window_bounds = array<i64: 128, 128>}]} {
    %c0_i32 = arith.constant 0 : i32
    %0 = arith.cmpi eq, %arg1, %c0_i32 : i32
    %1 = arith.extui %0 : i1 to i32
    %c0_i32_0 = arith.constant 0 : i32
    %2 = arith.cmpi ne, %1, %c0_i32_0 : i32
    scf.if %2 {
      %cst_10 = arith.constant 0.000000e+00 : f32
      %12 = vector.broadcast %cst_10 : f32 to vector<128x128xf32>
      %c0_11 = arith.constant 0 : index
      %c0_12 = arith.constant 0 : index
      %13 = vector.load %arg10[%c0_11, %c0_12] : memref<128x128xf32, #tpu.memory_space<vmem>>, vector<128x128xf32>
      tpu.vector_store %arg10[%c0_11, %c0_12], %12 {strides = array<i32>} : memref<128x128xf32, #tpu.memory_space<vmem>>, vector<128x128xf32>,
    } else {
    }
    %c0 = arith.constant 0 : index
    %c0_1 = arith.constant 0 : index
    %3 = vector.load %arg10[%c0, %c0_1] : memref<128x128xf32, #tpu.memory_space<vmem>>, vector<128x128xf32>
    %c0_2 = arith.constant 0 : index
    %c0_3 = arith.constant 0 : index
    %4 = vector.load %arg2[%c0_2, %c0_3] : memref<128x128xbf16, #tpu.memory_space<vmem>>, vector<128x128xbf16>
    %c0_4 = arith.constant 0 : index
    %c0_5 = arith.constant 0 : index
    %5 = vector.load %arg3[%c0_4, %c0_5] : memref<128x128xbf16, #tpu.memory_space<vmem>>, vector<128x128xbf16>
    %cst = arith.constant dense<0.000000e+00> : vector<128x128xf32>
    %6 = tpu.matmul %4, %5, %cst {dimension_numbers = #tpu.dot_dimension_numbers<[1], [0], [0], [1], [0, 0, 1, 1], [], []>} : vector<128x128xbf16>, vector<128x128xbf16>, vector<128x128xf32> -> vector<128x128xf32>
    %7 = arith.addf %3, %6 : vector<128x128xf32>
    %c0_6 = arith.constant 0 : index
    %c0_7 = arith.constant 0 : index
    %8 = vector.load %arg10[%c0_6, %c0_7] : memref<128x128xf32, #tpu.memory_space<vmem>>, vector<128x128xf32>
    tpu.vector_store %arg10[%c0_6, %c0_7], %7 {strides = array<i32>} : memref<128x128xf32, #tpu.memory_space<vmem>>, vector<128x128xf32>,
    %c0_i32_8 = arith.constant 0 : i32
    %9 = arith.cmpi eq, %arg1, %c0_i32_8 : i32
    %10 = arith.extui %9 : i1 to i32
    %c0_i32_9 = arith.constant 0 : i32
    %11 = arith.cmpi ne, %10, %c0_i32_9 : i32
    scf.if %11 {
      %c0_10 = arith.constant 0 : index
      %c0_11 = arith.constant 0 : index
      %12 = vector.load %arg10[%c0_10, %c0_11] : memref<128x128xf32, #tpu.memory_space<vmem>>, vector<128x128xf32>
      %13 = arith.truncf %12 : vector<128x128xf32> to vector<128x128xbf16>
      %c0_12 = arith.constant 0 : index
      %c0_13 = arith.constant 0 : index
      %14 = vector.load %arg5[%c0_12, %c0_13] : memref<128x128xbf16, #tpu.memory_space<vmem>>, vector<128x128xbf16>
      %cst_14 = arith.constant dense<0.000000e+00> : vector<128x128xf32>
      %15 = tpu.matmul %13, %14, %cst_14 {dimension_numbers = #tpu.dot_dimension_numbers<[1], [0], [0], [1], [0, 0, 1, 1], [], []>} : vector<128x128xbf16>, vector<128x128xbf16>, vector<128x128xf32> -> vector<128x128xf32>
      %c0_15 = arith.constant 0 : index
      %c0_16 = arith.constant 0 : index
      %16 = vector.load %arg4[%c0_15, %c0_16] : memref<128x128xbf16, #tpu.memory_space<vmem>>, vector<128x128xbf16>
      %c0_17 = arith.constant 0 : index
      %c0_18 = arith.constant 0 : index
      %17 = vector.load %arg6[%c0_17, %c0_18] : memref<128x128xbf16, #tpu.memory_space<vmem>>, vector<128x128xbf16>
      %cst_19 = arith.constant dense<0.000000e+00> : vector<128x128xf32>
      %18 = tpu.matmul %16, %17, %cst_19 {dimension_numbers = #tpu.dot_dimension_numbers<[1], [0], [0], [1], [0, 0, 1, 1], [], []>} : vector<128x128xbf16>, vector<128x128xbf16>, vector<128x128xf32> -> vector<128x128xf32>
      %19 = arith.addf %15, %18 : vector<128x128xf32>
      %c0_20 = arith.constant 0 : index
      %c0_21 = arith.constant 0 : index
      %20 = vector.load %arg7[%c0_20, %c0_21] : memref<1x128xf32, #tpu.memory_space<vmem>>, vector<1x128xf32>
      %21 = vector.broadcast %20 : vector<1x128xf32> to vector<128x128xf32>
      %22 = arith.mulf %19, %21 : vector<128x128xf32>
      %c0_22 = arith.constant 0 : index
      %c0_23 = arith.constant 0 : index
      %23 = vector.load %arg8[%c0_22, %c0_23] : memref<1x128xf32, #tpu.memory_space<vmem>>, vector<1x128xf32>
      %24 = vector.broadcast %23 : vector<1x128xf32> to vector<128x128xf32>
      %25 = arith.addf %22, %24 : vector<128x128xf32>
      %cst_24 = arith.constant 0.000000e+00 : f32
      %26 = vector.broadcast %cst_24 : f32 to vector<128x128xf32>
      %27 = arith.maximumf %25, %26 : vector<128x128xf32>
      %28 = arith.truncf %27 : vector<128x128xf32> to vector<128x128xbf16>
      %c0_25 = arith.constant 0 : index
      %c0_26 = arith.constant 0 : index
      %29 = vector.load %arg9[%c0_25, %c0_26] : memref<128x128xbf16, #tpu.memory_space<vmem>>, vector<128x128xbf16>
      tpu.vector_store %arg9[%c0_25, %c0_26], %28 {strides = array<i32>} : memref<128x128xbf16, #tpu.memory_space<vmem>>, vector<128x128xbf16>,
    } else {
    }
    return
  }
  func.func @transform_0(%arg0: i32, %arg1: i32) -> (i32, i32) {
    %c0_i32 = arith.constant 0 : i32
    return %arg0, %arg1 : i32, i32
  }
  func.func @transform_1(%arg0: i32, %arg1: i32) -> (i32, i32) {
    %c0_i32 = arith.constant 0 : i32
    %c0_i32_0 = arith.constant 0 : i32
    return %arg1, %c0_i32 : i32, i32
  }
  func.func @transform_2(%arg0: i32, %arg1: i32) -> (i32, i32) {
    %c0_i32 = arith.constant 0 : i32
    %c0_i32_0 = arith.constant 0 : i32
    return %arg0, %c0_i32 : i32, i32
  }
  func.func @transform_3(%arg0: i32, %arg1: i32) -> (i32, i32) {
    %c0_i32 = arith.constant 0 : i32
    %c0_i32_0 = arith.constant 0 : i32
    %c0_i32_1 = arith.constant 0 : i32
    return %c0_i32, %c0_i32_0 : i32, i32
  }
  func.func @transform_4(%arg0: i32, %arg1: i32) -> (i32, i32) {
    %c0_i32 = arith.constant 0 : i32
    %c0_i32_0 = arith.constant 0 : i32
    %c0_i32_1 = arith.constant 0 : i32
    return %c0_i32, %c0_i32_0 : i32, i32
  }
  func.func @transform_5(%arg0: i32, %arg1: i32) -> (i32, i32) {
    %c0_i32 = arith.constant 0 : i32
    %c0_i32_0 = arith.constant 0 : i32
    %c0_i32_1 = arith.constant 0 : i32
    return %c0_i32, %c0_i32_0 : i32, i32
  }
  func.func @transform_6(%arg0: i32, %arg1: i32) -> (i32, i32) {
    %c0_i32 = arith.constant 0 : i32
    %c0_i32_0 = arith.constant 0 : i32
    %c0_i32_1 = arith.constant 0 : i32
    return %c0_i32, %c0_i32_0 : i32, i32
  }
  func.func @transform_7(%arg0: i32, %arg1: i32) -> (i32, i32) {
    %c0_i32 = arith.constant 0 : i32
    %c0_i32_0 = arith.constant 0 : i32
    return %arg0, %c0_i32 : i32, i32
  }
}

module attributes {stable_mosaic.version = 11 : i64} {
  func.func @_sage_logsoftmax_var_kernel(%arg0: i32, %arg1: i32, %arg2: memref<128x128xbf16, #tpu.memory_space<vmem>>, %arg3: memref<128x128xbf16, #tpu.memory_space<vmem>>, %arg4: memref<128x128xbf16, #tpu.memory_space<vmem>>, %arg5: memref<128x128xbf16, #tpu.memory_space<vmem>>, %arg6: memref<128x128xbf16, #tpu.memory_space<vmem>>, %arg7: memref<1x128xf32, #tpu.memory_space<vmem>>, %arg8: memref<128x128xf32, #tpu.memory_space<vmem>>, %arg9: memref<8x128xf32, #tpu.memory_space<vmem>>, %arg10: memref<128x128xf32, #tpu.memory_space<vmem>>) attributes {dimension_semantics = [#tpu.dimension_semantics<parallel>, #tpu.dimension_semantics<arbitrary>], iteration_bounds = array<i64: 1, 1>, scalar_prefetch = 0 : i64, scratch_operands = 1 : i64, tpu.core_type = #tpu.core_type<tc>, window_params = [{transform_indices = @transform_0, window_bounds = array<i64: 128, 128>}, {transform_indices = @transform_1, window_bounds = array<i64: 128, 128>}, {transform_indices = @transform_2, window_bounds = array<i64: 128, 128>}, {pipeline_mode = #tpu.pipeline_mode<synchronous>, transform_indices = @transform_3, window_bounds = array<i64: 128, 128>}, {pipeline_mode = #tpu.pipeline_mode<synchronous>, transform_indices = @transform_4, window_bounds = array<i64: 128, 128>}, {pipeline_mode = #tpu.pipeline_mode<synchronous>, transform_indices = @transform_5, window_bounds = array<i64: 1, 128>}, {transform_indices = @transform_6, window_bounds = array<i64: 128, 128>}, {transform_indices = @transform_7, window_bounds = array<i64: 8, 128>}]} {
    %c0_i32 = arith.constant 0 : i32
    %0 = arith.cmpi eq, %arg1, %c0_i32 : i32
    %1 = arith.extui %0 : i1 to i32
    %c0_i32_0 = arith.constant 0 : i32
    %2 = arith.cmpi ne, %1, %c0_i32_0 : i32
    scf.if %2 {
      %cst_10 = arith.constant 0.000000e+00 : f32
      %12 = vector.broadcast %cst_10 : f32 to vector<128x128xf32>
      %c0_11 = arith.constant 0 : index
      %c0_12 = arith.constant 0 : index
      %13 = vector.load %arg10[%c0_11, %c0_12] : memref<128x128xf32, #tpu.memory_space<vmem>>, vector<128x128xf32>
      tpu.vector_store %arg10[%c0_11, %c0_12], %12 {strides = array<i32>} : memref<128x128xf32, #tpu.memory_space<vmem>>, vector<128x128xf32>,
    } else {
    }
    %c0 = arith.constant 0 : index
    %c0_1 = arith.constant 0 : index
    %3 = vector.load %arg10[%c0, %c0_1] : memref<128x128xf32, #tpu.memory_space<vmem>>, vector<128x128xf32>
    %c0_2 = arith.constant 0 : index
    %c0_3 = arith.constant 0 : index
    %4 = vector.load %arg2[%c0_2, %c0_3] : memref<128x128xbf16, #tpu.memory_space<vmem>>, vector<128x128xbf16>
    %c0_4 = arith.constant 0 : index
    %c0_5 = arith.constant 0 : index
    %5 = vector.load %arg3[%c0_4, %c0_5] : memref<128x128xbf16, #tpu.memory_space<vmem>>, vector<128x128xbf16>
    %cst = arith.constant dense<0.000000e+00> : vector<128x128xf32>
    %6 = tpu.matmul %4, %5, %cst {dimension_numbers = #tpu.dot_dimension_numbers<[1], [0], [0], [1], [0, 0, 1, 1], [], []>} : vector<128x128xbf16>, vector<128x128xbf16>, vector<128x128xf32> -> vector<128x128xf32>
    %7 = arith.addf %3, %6 : vector<128x128xf32>
    %c0_6 = arith.constant 0 : index
    %c0_7 = arith.constant 0 : index
    %8 = vector.load %arg10[%c0_6, %c0_7] : memref<128x128xf32, #tpu.memory_space<vmem>>, vector<128x128xf32>
    tpu.vector_store %arg10[%c0_6, %c0_7], %7 {strides = array<i32>} : memref<128x128xf32, #tpu.memory_space<vmem>>, vector<128x128xf32>,
    %c0_i32_8 = arith.constant 0 : i32
    %9 = arith.cmpi eq, %arg1, %c0_i32_8 : i32
    %10 = arith.extui %9 : i1 to i32
    %c0_i32_9 = arith.constant 0 : i32
    %11 = arith.cmpi ne, %10, %c0_i32_9 : i32
    scf.if %11 {
      %c0_10 = arith.constant 0 : index
      %c0_11 = arith.constant 0 : index
      %12 = vector.load %arg10[%c0_10, %c0_11] : memref<128x128xf32, #tpu.memory_space<vmem>>, vector<128x128xf32>
      %13 = arith.truncf %12 : vector<128x128xf32> to vector<128x128xbf16>
      %c0_12 = arith.constant 0 : index
      %c0_13 = arith.constant 0 : index
      %14 = vector.load %arg5[%c0_12, %c0_13] : memref<128x128xbf16, #tpu.memory_space<vmem>>, vector<128x128xbf16>
      %cst_14 = arith.constant dense<0.000000e+00> : vector<128x128xf32>
      %15 = tpu.matmul %13, %14, %cst_14 {dimension_numbers = #tpu.dot_dimension_numbers<[1], [0], [0], [1], [0, 0, 1, 1], [], []>} : vector<128x128xbf16>, vector<128x128xbf16>, vector<128x128xf32> -> vector<128x128xf32>
      %c0_15 = arith.constant 0 : index
      %c0_16 = arith.constant 0 : index
      %16 = vector.load %arg4[%c0_15, %c0_16] : memref<128x128xbf16, #tpu.memory_space<vmem>>, vector<128x128xbf16>
      %c0_17 = arith.constant 0 : index
      %c0_18 = arith.constant 0 : index
      %17 = vector.load %arg6[%c0_17, %c0_18] : memref<128x128xbf16, #tpu.memory_space<vmem>>, vector<128x128xbf16>
      %cst_19 = arith.constant dense<0.000000e+00> : vector<128x128xf32>
      %18 = tpu.matmul %16, %17, %cst_19 {dimension_numbers = #tpu.dot_dimension_numbers<[1], [0], [0], [1], [0, 0, 1, 1], [], []>} : vector<128x128xbf16>, vector<128x128xbf16>, vector<128x128xf32> -> vector<128x128xf32>
      %19 = arith.addf %15, %18 : vector<128x128xf32>
      %c0_20 = arith.constant 0 : index
      %c0_21 = arith.constant 0 : index
      %20 = vector.load %arg7[%c0_20, %c0_21] : memref<1x128xf32, #tpu.memory_space<vmem>>, vector<1x128xf32>
      %21 = vector.broadcast %20 : vector<1x128xf32> to vector<128x128xf32>
      %22 = arith.addf %19, %21 : vector<128x128xf32>
      %23 = tpu.iota {dimensions = array<i32: 1>} : vector<128x128xi32>
      %24 = tpu.iota {dimensions = array<i32: 0>} : vector<128x128xi32>
      %c128_i32 = arith.constant 128 : i32
      %25 = arith.muli %arg0, %c128_i32 : i32
      %26 = vector.broadcast %25 : i32 to vector<128x128xi32>
      %27 = arith.addi %24, %26 : vector<128x128xi32>
      %c8_i32 = arith.constant 8 : i32
      %28 = vector.broadcast %c8_i32 : i32 to vector<128x128xi32>
      %29 = arith.cmpi slt, %23, %28 : vector<128x128xi32>
      %c16_i32 = arith.constant 16 : i32
      %30 = vector.broadcast %c16_i32 : i32 to vector<128x128xi32>
      %31 = arith.cmpi slt, %27, %30 : vector<128x128xi32>
      %cst_22 = arith.constant -1.000000e+30 : f32
      %32 = vector.broadcast %cst_22 : f32 to vector<128x128xf32>
      %33 = arith.select %29, %22, %32 : vector<128x128xi1>, vector<128x128xf32>
      %cst_23 = arith.constant dense<0xFF800000> : vector<128xf32>
      %34 = vector.multi_reduction <maximumf>, %33, %cst_23 [1] : vector<128x128xf32> to vector<128xf32>
      %35 = vector.shape_cast %34 : vector<128xf32> to vector<128x1xf32>
      %36 = vector.broadcast %35 : vector<128x1xf32> to vector<128x128xf32>
      %37 = arith.subf %33, %36 : vector<128x128xf32>
      %38 = math.exp %37 : vector<128x128xf32>
      %cst_24 = arith.constant dense<0.000000e+00> : vector<128xf32>
      %39 = vector.multi_reduction <add>, %38, %cst_24 [1] : vector<128x128xf32> to vector<128xf32>
      %40 = vector.shape_cast %39 : vector<128xf32> to vector<128x1xf32>
      %41 = math.log %40 : vector<128x1xf32>
      %42 = vector.broadcast %41 : vector<128x1xf32> to vector<128x128xf32>
      %43 = arith.subf %37, %42 : vector<128x128xf32>
      %c0_25 = arith.constant 0 : index
      %c0_26 = arith.constant 0 : index
      %44 = vector.load %arg8[%c0_25, %c0_26] : memref<128x128xf32, #tpu.memory_space<vmem>>, vector<128x128xf32>
      tpu.vector_store %arg8[%c0_25, %c0_26], %43 {strides = array<i32>} : memref<128x128xf32, #tpu.memory_space<vmem>>, vector<128x128xf32>,
      %45 = arith.andi %29, %31 : vector<128x128xi1>
      %cst_27 = arith.constant 0.000000e+00 : f32
      %46 = vector.broadcast %cst_27 : f32 to vector<128x128xf32>
      %47 = arith.select %45, %22, %46 : vector<128x128xi1>, vector<128x128xf32>
      %48 = vector.shape_cast %47 : vector<128x128xf32> to vector<1x128x128xf32>
      %cst_28 = arith.constant dense<0.000000e+00> : vector<1xf32>
      %49 = vector.multi_reduction <add>, %48, %cst_28 [1, 2] : vector<1x128x128xf32> to vector<1xf32>
      %50 = vector.shape_cast %49 : vector<1xf32> to vector<1x1x1xf32>
      %51 = vector.extract %50[0, 0, 0] : f32 from vector<1x1x1xf32>
      %52 = arith.mulf %47, %47 : vector<128x128xf32>
      %53 = vector.shape_cast %52 : vector<128x128xf32> to vector<1x128x128xf32>
      %cst_29 = arith.constant dense<0.000000e+00> : vector<1xf32>
      %54 = vector.multi_reduction <add>, %53, %cst_29 [1, 2] : vector<1x128x128xf32> to vector<1xf32>
      %55 = vector.shape_cast %54 : vector<1xf32> to vector<1x1x1xf32>
      %56 = vector.extract %55[0, 0, 0] : f32 from vector<1x1x1xf32>
      %57 = tpu.iota {dimensions = array<i32: 0>} : vector<8x128xi32>
      %58 = tpu.iota {dimensions = array<i32: 1>} : vector<8x128xi32>
      %c0_i32_30 = arith.constant 0 : i32
      %59 = vector.broadcast %c0_i32_30 : i32 to vector<8x128xi32>
      %60 = arith.cmpi eq, %57, %59 : vector<8x128xi32>
      %c0_i32_31 = arith.constant 0 : i32
      %61 = vector.broadcast %c0_i32_31 : i32 to vector<8x128xi32>
      %62 = arith.cmpi eq, %58, %61 : vector<8x128xi32>
      %63 = arith.andi %60, %62 : vector<8x128xi1>
      %c0_i32_32 = arith.constant 0 : i32
      %64 = vector.broadcast %c0_i32_32 : i32 to vector<8x128xi32>
      %65 = arith.cmpi eq, %57, %64 : vector<8x128xi32>
      %c1_i32 = arith.constant 1 : i32
      %66 = vector.broadcast %c1_i32 : i32 to vector<8x128xi32>
      %67 = arith.cmpi eq, %58, %66 : vector<8x128xi32>
      %68 = arith.andi %65, %67 : vector<8x128xi1>
      %cst_33 = arith.constant 0.000000e+00 : f32
      %69 = vector.broadcast %56 : f32 to vector<8x128xf32>
      %70 = vector.broadcast %cst_33 : f32 to vector<8x128xf32>
      %71 = arith.select %68, %69, %70 : vector<8x128xi1>, vector<8x128xf32>
      %72 = vector.broadcast %51 : f32 to vector<8x128xf32>
      %73 = arith.select %63, %72, %71 : vector<8x128xi1>, vector<8x128xf32>
      %c0_34 = arith.constant 0 : index
      %c0_35 = arith.constant 0 : index
      %74 = vector.load %arg9[%c0_34, %c0_35] : memref<8x128xf32, #tpu.memory_space<vmem>>, vector<8x128xf32>
      tpu.vector_store %arg9[%c0_34, %c0_35], %73 {strides = array<i32>} : memref<8x128xf32, #tpu.memory_space<vmem>>, vector<8x128xf32>,
    } else {
    }
    return
  }
  func.func @transform_0(%arg0: i32, %arg1: i32) -> (i32, i32) {
    %c0_i32 = arith.constant 0 : i32
    return %arg0, %arg1 : i32, i32
  }
  func.func @transform_1(%arg0: i32, %arg1: i32) -> (i32, i32) {
    %c0_i32 = arith.constant 0 : i32
    %c0_i32_0 = arith.constant 0 : i32
    return %arg1, %c0_i32 : i32, i32
  }
  func.func @transform_2(%arg0: i32, %arg1: i32) -> (i32, i32) {
    %c0_i32 = arith.constant 0 : i32
    %c0_i32_0 = arith.constant 0 : i32
    return %arg0, %c0_i32 : i32, i32
  }
  func.func @transform_3(%arg0: i32, %arg1: i32) -> (i32, i32) {
    %c0_i32 = arith.constant 0 : i32
    %c0_i32_0 = arith.constant 0 : i32
    %c0_i32_1 = arith.constant 0 : i32
    return %c0_i32, %c0_i32_0 : i32, i32
  }
  func.func @transform_4(%arg0: i32, %arg1: i32) -> (i32, i32) {
    %c0_i32 = arith.constant 0 : i32
    %c0_i32_0 = arith.constant 0 : i32
    %c0_i32_1 = arith.constant 0 : i32
    return %c0_i32, %c0_i32_0 : i32, i32
  }
  func.func @transform_5(%arg0: i32, %arg1: i32) -> (i32, i32) {
    %c0_i32 = arith.constant 0 : i32
    %c0_i32_0 = arith.constant 0 : i32
    %c0_i32_1 = arith.constant 0 : i32
    return %c0_i32, %c0_i32_0 : i32, i32
  }
  func.func @transform_6(%arg0: i32, %arg1: i32) -> (i32, i32) {
    %c0_i32 = arith.constant 0 : i32
    %c0_i32_0 = arith.constant 0 : i32
    return %arg0, %c0_i32 : i32, i32
  }
  func.func @transform_7(%arg0: i32, %arg1: i32) -> (i32, i32) {
    %c0_i32 = arith.constant 0 : i32
    %c0_i32_0 = arith.constant 0 : i32
    return %arg0, %c0_i32 : i32, i32
  }
}

</mosaic_0001>

<llo_original>
// kernel: sageweight_forward.2
$region0: #{sageweight_forward.2}
  #allocation0 [shape = 'u32[]', space=smem, size = 0x4, offset = 0x4, fixed_abs, tag = 'smem constant byte address 0x4 - core index']
  #allocation1 [shape = 'u32[144,128]{1,0:T(1,128)}', space=vmem, size = 0x12000, scoped, tag = 'internal scratch']
  #allocation2 [shape = 'f32[128,128]{1,0:T(8,128)}', space=vmem, size = 0x10000, scoped, tag = 'scratch operand']
  %s0 = inlined_call_operand.vmem [shape: bf16[128,128], index: 0, kind: input, shape index: {}]
  %s1 = inlined_call_operand.vmem [shape: bf16[128,128], index: 1, kind: input, shape index: {}, may-alias: {1,2}]
  %s2 = inlined_call_operand.vmem [shape: bf16[128,128], index: 2, kind: input, shape index: {}, may-alias: {1,2}]
  %s3 = inlined_call_operand.vmem [shape: bf16[128,128], index: 3, kind: input, shape index: {}]
  %s4 = inlined_call_operand.vmem [shape: bf16[128,128], index: 4, kind: input, shape index: {}]
  %s5 = inlined_call_operand.vmem [shape: f32[1,128], index: 5, kind: input, shape index: {}]
  %s6 = inlined_call_operand.vmem [shape: f32[1,128], index: 6, kind: input, shape index: {}]
  %s7 = inlined_call_operand.vmem [shape: bf16[128,128], index: 7, kind: output, shape index: {}]
  %s8 = sld [smem:[#allocation0]]
  $region46: #{sageweight_forward.2} parent=0
    _
  %s10 = ssub.s32 1, %s8
  %s11 = scalar_select 0, %s10, %s8
  // Predicated region
  $region2: #{sageweight_forward.2} parent=0 // pred_check
    _
  $region3: #{sageweight_forward.2} parent=0 // pred_check_branch
    %13 = sbr.rel (0) target = $region5
  $region4: #{sageweight_forward.2} parent=0 // pred_region
    _
  $region5: #{sageweight_forward.2} parent=0 // pred_fallthru
    _
  // Predicated region
  $region6: #{sageweight_forward.2} parent=0 // pred_check
    _
  $region7: #{sageweight_forward.2} parent=0 // pred_check_branch
    %15 = sbr.rel (0) target = $region9
  $region8: #{sageweight_forward.2} parent=0 // pred_region
    _
  $region9: #{sageweight_forward.2} parent=0 // pred_fallthru
    _
  // Predicated region
  $region10: #{sageweight_forward.2} parent=0 // pred_check
    _
  $region11: #{sageweight_forward.2} parent=0 // pred_check_branch
    %17 = sbr.rel (0) target = $region13
  $region12: #{sageweight_forward.2} parent=0 // pred_region
    _
  $region13: #{sageweight_forward.2} parent=0 // pred_fallthru
    _
  // Predicated region
  $region14: #{sageweight_forward.2} parent=0 // pred_check
    _
  $region15: #{sageweight_forward.2} parent=0 // pred_check_branch
    %19 = sbr.rel (0) target = $region17
  $region16: #{sageweight_forward.2} parent=0 // pred_region
    _
  $region17: #{sageweight_forward.2} parent=0 // pred_fallthru
    _
  // Predicated region
  $region18: #{sageweight_forward.2} parent=0 // pred_check
    _
  $region19: #{sageweight_forward.2} parent=0 // pred_check_branch
    %21 = sbr.rel (0) target = $region21
  $region20: #{sageweight_forward.2} parent=0 // pred_region
    _
  $region21: #{sageweight_forward.2} parent=0 // pred_fallthru
    _
  // Predicated region
  $region22: #{sageweight_forward.2} parent=0 // pred_check
    _
  $region23: #{sageweight_forward.2} parent=0 // pred_check_branch
    %23 = sbr.rel (0) target = $region25
  $region24: #{sageweight_forward.2} parent=0 // pred_region
    _
  $region25: #{sageweight_forward.2} parent=0 // pred_fallthru
    _
  // Predicated region
  $region26: #{sageweight_forward.2} parent=0 // pred_check
    _
  $region27: #{sageweight_forward.2} parent=0 // pred_check_branch
    %25 = sbr.rel (0) target = $region29
  $region28: #{sageweight_forward.2} parent=0 // pred_region
    _
  $region29: #{sageweight_forward.2} parent=0 // pred_fallthru
    _
  %p27 = scmp.eq.s32.totalorder 0, 0
  // Predicated region
  $region30: #{sageweight_forward.2} parent=0 // pred_check
    %p28 = pneg %p27
  $region31: #{sageweight_forward.2} parent=0 // pred_check_branch
    %30 = sbr.rel (%p28) target = $region33
  $region32: #{sageweight_forward.2} parent=0 // pred_region
    %31 = vst [vmem:[#allocation2] sm:$0xff] 0.0
    %32 = vst [vmem:[#allocation2 + $0x8] sm:$0xff] 0.0
    %33 = vst [vmem:[#allocation2 + $0x10] sm:$0xff] 0.0
    %34 = vst [vmem:[#allocation2 + $0x18] sm:$0xff] 0.0
    %35 = vst [vmem:[#allocation2 + $0x20] sm:$0xff] 0.0
    %36 = vst [vmem:[#allocation2 + $0x28] sm:$0xff] 0.0
    %37 = vst [vmem:[#allocation2 + $0x30] sm:$0xff] 0.0
    %38 = vst [vmem:[#allocation2 + $0x38] sm:$0xff] 0.0
    %39 = vst [vmem:[#allocation2 + $0x40] sm:$0xff] 0.0
    %40 = vst [vmem:[#allocation2 + $0x48] sm:$0xff] 0.0
    %41 = vst [vmem:[#allocation2 + $0x50] sm:$0xff] 0.0
    %42 = vst [vmem:[#allocation2 + $0x58] sm:$0xff] 0.0
    %43 = vst [vmem:[#allocation2 + $0x60] sm:$0xff] 0.0
    %44 = vst [vmem:[#allocation2 + $0x68] sm:$0xff] 0.0
    %45 = vst [vmem:[#allocation2 + $0x70] sm:$0xff] 0.0
    %46 = vst [vmem:[#allocation2 + $0x78] sm:$0xff] 0.0
  $region33: #{sageweight_forward.2} parent=0 // pred_fallthru
    _
  %v47 = vld [vmem:[#allocation2] sm:$0xff]
  %v48 = vld [vmem:[#allocation2 + $0x8] sm:$0xff]
  %v49 = vld [vmem:[#allocation2 + $0x10] sm:$0xff]
  %v50 = vld [vmem:[#allocation2 + $0x18] sm:$0xff]
  %v51 = vld [vmem:[#allocation2 + $0x20] sm:$0xff]
  %v52 = vld [vmem:[#allocation2 + $0x28] sm:$0xff]
  %v53 = vld [vmem:[#allocation2 + $0x30] sm:$0xff]
  %v54 = vld [vmem:[#allocation2 + $0x38] sm:$0xff]
  %v55 = vld [vmem:[#allocation2 + $0x40] sm:$0xff]
  %v56 = vld [vmem:[#allocation2 + $0x48] sm:$0xff]
  %v57 = vld [vmem:[#allocation2 + $0x50] sm:$0xff]
  %v58 = vld [vmem:[#allocation2 + $0x58] sm:$0xff]
  %v59 = vld [vmem:[#allocation2 + $0x60] sm:$0xff]
  %v60 = vld [vmem:[#allocation2 + $0x68] sm:$0xff]
  %v61 = vld [vmem:[#allocation2 + $0x70] sm:$0xff]
  %v62 = vld [vmem:[#allocation2 + $0x78] sm:$0xff]
  %v63 = vld [vmem:[%s0] sm:$0xf]
  %v64 = vld [vmem:[%s0 + $0x4] sm:$0xf]
  %v65 = vld [vmem:[%s0 + $0x8] sm:$0xf]
  %v66 = vld [vmem:[%s0 + $0xc] sm:$0xf]
  %v67 = vld [vmem:[%s0 + $0x10] sm:$0xf]
  %v68 = vld [vmem:[%s0 + $0x14] sm:$0xf]
  %v69 = vld [vmem:[%s0 + $0x18] sm:$0xf]
  %v70 = vld [vmem:[%s0 + $0x1c] sm:$0xf]
  %v71 = vld [vmem:[%s0 + $0x20] sm:$0xf]
  %v72 = vld [vmem:[%s0 + $0x24] sm:$0xf]
  %v73 = vld [vmem:[%s0 + $0x28] sm:$0xf]
  %v74 = vld [vmem:[%s0 + $0x2c] sm:$0xf]
  %v75 = vld [vmem:[%s0 + $0x30] sm:$0xf]
  %v76 = vld [vmem:[%s0 + $0x34] sm:$0xf]
  %v77 = vld [vmem:[%s0 + $0x38] sm:$0xf]
  %v78 = vld [vmem:[%s0 + $0x3c] sm:$0xf]
  %v79 = vld [vmem:[%s1] sm:$0xf]
  %v80 = vld [vmem:[%s1 + $0x4] sm:$0xf]
  %v81 = vld [vmem:[%s1 + $0x8] sm:$0xf]
  %v82 = vld [vmem:[%s1 + $0xc] sm:$0xf]
  %v83 = vld [vmem:[%s1 + $0x10] sm:$0xf]
  %v84 = vld [vmem:[%s1 + $0x14] sm:$0xf]
  %v85 = vld [vmem:[%s1 + $0x18] sm:$0xf]
  %v86 = vld [vmem:[%s1 + $0x1c] sm:$0xf]
  %v87 = vld [vmem:[%s1 + $0x20] sm:$0xf]
  %v88 = vld [vmem:[%s1 + $0x24] sm:$0xf]
  %v89 = vld [vmem:[%s1 + $0x28] sm:$0xf]
  %v90 = vld [vmem:[%s1 + $0x2c] sm:$0xf]
  %v91 = vld [vmem:[%s1 + $0x30] sm:$0xf]
  %v92 = vld [vmem:[%s1 + $0x34] sm:$0xf]
  %v93 = vld [vmem:[%s1 + $0x38] sm:$0xf]
  %v94 = vld [vmem:[%s1 + $0x3c] sm:$0xf]
  %v111 = vunpack.c.l.b16 %v63
  %v112 = vunpack.c.l.b16 %v64
  %v113 = vunpack.c.l.b16 %v65
  %v114 = vunpack.c.l.b16 %v66
  %v115 = vunpack.c.l.b16 %v67
  %v116 = vunpack.c.l.b16 %v68
  %v117 = vunpack.c.l.b16 %v69
  %v118 = vunpack.c.l.b16 %v70
  %v119 = vunpack.c.l.b16 %v71
  %v120 = vunpack.c.l.b16 %v72
  %v121 = vunpack.c.l.b16 %v73
  %v122 = vunpack.c.l.b16 %v74
  %v123 = vunpack.c.l.b16 %v75
  %v124 = vunpack.c.l.b16 %v76
  %v125 = vunpack.c.l.b16 %v77
  %v126 = vunpack.c.l.b16 %v78
  %v127 = vpack.c.b16 %v112, %v111
  %v128 = vpack.c.b16 %v114, %v113
  %v129 = vpack.c.b16 %v116, %v115
  %v130 = vpack.c.b16 %v118, %v117
  %v131 = vpack.c.b16 %v120, %v119
  %v132 = vpack.c.b16 %v122, %v121
  %v133 = vpack.c.b16 %v124, %v123
  %v134 = vpack.c.b16 %v126, %v125
  %v159 = vunpack.c.l.b16 %v79
  %v160 = vunpack.c.l.b16 %v80
  %v161 = vunpack.c.l.b16 %v81
  %v162 = vunpack.c.l.b16 %v82
  %v163 = vunpack.c.l.b16 %v83
  %v164 = vunpack.c.l.b16 %v84
  %v165 = vunpack.c.l.b16 %v85
  %v166 = vunpack.c.l.b16 %v86
  %v167 = vunpack.c.l.b16 %v87
  %v168 = vunpack.c.l.b16 %v88
  %v169 = vunpack.c.l.b16 %v89
  %v170 = vunpack.c.l.b16 %v90
  %v171 = vunpack.c.l.b16 %v91
  %v172 = vunpack.c.l.b16 %v92
  %v173 = vunpack.c.l.b16 %v93
  %v174 = vunpack.c.l.b16 %v94
  %v175 = vpack.c.b16 %v160, %v159
  %v176 = vpack.c.b16 %v162, %v161
  %v177 = vpack.c.b16 %v164, %v163
  %v178 = vpack.c.b16 %v166, %v165
  %v179 = vpack.c.b16 %v168, %v167
  %v180 = vpack.c.b16 %v170, %v169
  %v181 = vpack.c.b16 %v172, %v171
  %v182 = vpack.c.b16 %v174, %v173
  %191 = vmatprep.subr.bf16.mxu0 0
  %192 = vmatpush1.bf16.msra.mxu0 %v182
  %193 = vmatprep.subr.bf16.mxu0 0
  %194 = vmatpush1.bf16.msra.mxu0 %v181
  %195 = vmatprep.subr.bf16.mxu0 0
  %196 = vmatpush1.bf16.msra.mxu0 %v180
  %197 = vmatprep.subr.bf16.mxu0 0
  %198 = vmatpush1.bf16.msra.mxu0 %v179
  %199 = vmatprep.subr.bf16.mxu0 0
  %200 = vmatpush1.bf16.msra.mxu0 %v178
  %201 = vmatprep.subr.bf16.mxu0 0
  %202 = vmatpush1.bf16.msra.mxu0 %v177
  %203 = vmatprep.subr.bf16.mxu0 0
  %204 = vmatpush1.bf16.msra.mxu0 %v176
  %205 = vmatprep.subr.bf16.mxu0 0
  %206 = vmatpush1.bf16.msra.mxu0 %v175
  %207 = vmatprep.subr.bf16.mxu0 0
  %208 = vmatpush2.bf16.msra.mxu0 0
  %209 = vmatprep.subr.bf16.mxu0 0
  %210 = vmatpush2.bf16.msra.mxu0 0
  %211 = vmatprep.subr.bf16.mxu0 0
  %212 = vmatpush2.bf16.msra.mxu0 0
  %213 = vmatprep.subr.bf16.mxu0 0
  %214 = vmatpush2.bf16.msra.mxu0 0
  %215 = vmatprep.subr.bf16.mxu0 0
  %216 = vmatpush2.bf16.msra.mxu0 0
  %217 = vmatprep.subr.bf16.mxu0 0
  %218 = vmatpush2.bf16.msra.mxu0 0
  %219 = vmatprep.subr.bf16.mxu0 0
  %220 = vmatpush2.bf16.msra.mxu0 0
  %221 = vmatprep.subr.bf16.mxu0 0
  %222 = vmatpush2.bf16.msra.mxu0 0
  %223 = vmatprep.mubr.bf16.mxu0 0
  %224 = vmatmul.mubr.bf16.gmra.mxu0 %v127
  %v225 = vpop.f32.mrf.mxu0
  %v226 = vadd.f32 0.0, %v225
  %v227 = vpop.f32.mrf.mxu0
  %v228 = vpop.f32.mrf.mxu0
  %v229 = vadd.f32 0.0, %v228
  %v230 = vpop.f32.mrf.mxu0
  %231 = vmatprep.mubr.bf16.mxu0 0
  %232 = vmatmul.mubr.bf16.gmra.mxu0 %v128
  %v233 = vpop.f32.mrf.mxu0
  %v234 = vadd.f32 0.0, %v233
  %v235 = vpop.f32.mrf.mxu0
  %v236 = vpop.f32.mrf.mxu0
  %v237 = vadd.f32 0.0, %v236
  %v238 = vpop.f32.mrf.mxu0
  %239 = vmatprep.mubr.bf16.mxu0 0
  %240 = vmatmul.mubr.bf16.gmra.mxu0 %v129
  %v241 = vpop.f32.mrf.mxu0
  %v242 = vadd.f32 0.0, %v241
  %v243 = vpop.f32.mrf.mxu0
  %v244 = vpop.f32.mrf.mxu0
  %v245 = vadd.f32 0.0, %v244
  %v246 = vpop.f32.mrf.mxu0
  %247 = vmatprep.mubr.bf16.mxu0 0
  %248 = vmatmul.mubr.bf16.gmra.mxu0 %v130
  %v249 = vpop.f32.mrf.mxu0
  %v250 = vadd.f32 0.0, %v249
  %v251 = vpop.f32.mrf.mxu0
  %v252 = vpop.f32.mrf.mxu0
  %v253 = vadd.f32 0.0, %v252
  %v254 = vpop.f32.mrf.mxu0
  %255 = vmatprep.mubr.bf16.mxu0 0
  %256 = vmatmul.mubr.bf16.gmra.mxu0 %v131
  %v257 = vpop.f32.mrf.mxu0
  %v258 = vadd.f32 0.0, %v257
  %v259 = vpop.f32.mrf.mxu0
  %v260 = vpop.f32.mrf.mxu0
  %v261 = vadd.f32 0.0, %v260
  %v262 = vpop.f32.mrf.mxu0
  %263 = vmatprep.mubr.bf16.mxu0 0
  %264 = vmatmul.mubr.bf16.gmra.mxu0 %v132
  %v265 = vpop.f32.mrf.mxu0
  %v266 = vadd.f32 0.0, %v265
  %v267 = vpop.f32.mrf.mxu0
  %v268 = vpop.f32.mrf.mxu0
  %v269 = vadd.f32 0.0, %v268
  %v270 = vpop.f32.mrf.mxu0
  %271 = vmatprep.mubr.bf16.mxu0 0
  %272 = vmatmul.mubr.bf16.gmra.mxu0 %v133
  %v273 = vpop.f32.mrf.mxu0
  %v274 = vadd.f32 0.0, %v273
  %v275 = vpop.f32.mrf.mxu0
  %v276 = vpop.f32.mrf.mxu0
  %v277 = vadd.f32 0.0, %v276
  %v278 = vpop.f32.mrf.mxu0
  %279 = vmatprep.mubr.bf16.mxu0 0
  %280 = vmatmul.mubr.bf16.gmra.mxu0 %v134
  %v281 = vpop.f32.mrf.mxu0
  %v282 = vadd.f32 0.0, %v281
  %v283 = vpop.f32.mrf.mxu0
  %v284 = vpop.f32.mrf.mxu0
  %v285 = vadd.f32 0.0, %v284
  %v286 = vpop.f32.mrf.mxu0
  %287 = vdwg.mxu0
  %v288 = vadd.f32 %v47, %v226
  %v289 = vadd.f32 %v48, %v229
  %v290 = vadd.f32 %v49, %v234
  %v291 = vadd.f32 %v50, %v237
  %v292 = vadd.f32 %v51, %v242
  %v293 = vadd.f32 %v52, %v245
  %v294 = vadd.f32 %v53, %v250
  %v295 = vadd.f32 %v54, %v253
  %v296 = vadd.f32 %v55, %v258
  %v297 = vadd.f32 %v56, %v261
  %v298 = vadd.f32 %v57, %v266
  %v299 = vadd.f32 %v58, %v269
  %v300 = vadd.f32 %v59, %v274
  %v301 = vadd.f32 %v60, %v277
  %v302 = vadd.f32 %v61, %v282
  %v303 = vadd.f32 %v62, %v285
  %304 = vst [vmem:[#allocation2] sm:$0xff] %v288
  %305 = vst [vmem:[#allocation2 + $0x8] sm:$0xff] %v289
  %306 = vst [vmem:[#allocation2 + $0x10] sm:$0xff] %v290
  %307 = vst [vmem:[#allocation2 + $0x18] sm:$0xff] %v291
  %308 = vst [vmem:[#allocation2 + $0x20] sm:$0xff] %v292
  %309 = vst [vmem:[#allocation2 + $0x28] sm:$0xff] %v293
  %310 = vst [vmem:[#allocation2 + $0x30] sm:$0xff] %v294
  %311 = vst [vmem:[#allocation2 + $0x38] sm:$0xff] %v295
  %312 = vst [vmem:[#allocation2 + $0x40] sm:$0xff] %v296
  %313 = vst [vmem:[#allocation2 + $0x48] sm:$0xff] %v297
  %314 = vst [vmem:[#allocation2 + $0x50] sm:$0xff] %v298
  %315 = vst [vmem:[#allocation2 + $0x58] sm:$0xff] %v299
  %316 = vst [vmem:[#allocation2 + $0x60] sm:$0xff] %v300
  %317 = vst [vmem:[#allocation2 + $0x68] sm:$0xff] %v301
  %318 = vst [vmem:[#allocation2 + $0x70] sm:$0xff] %v302
  %319 = vst [vmem:[#allocation2 + $0x78] sm:$0xff] %v303
  // Predicated region
  $region34: #{sageweight_forward.2} parent=0 // pred_check
    %p320 = pneg %p27
  $region35: #{sageweight_forward.2} parent=0 // pred_check_branch
    %322 = sbr.rel (%p320) target = $region37
  $region36: #{sageweight_forward.2} parent=0 // pred_region
    %v323 = vld [vmem:[#allocation2] sm:$0xff]
    %v324 = vld [vmem:[#allocation2 + $0x8] sm:$0xff]
    %v325 = vld [vmem:[#allocation2 + $0x10] sm:$0xff]
    %v326 = vld [vmem:[#allocation2 + $0x18] sm:$0xff]
    %v327 = vld [vmem:[#allocation2 + $0x20] sm:$0xff]
    %v328 = vld [vmem:[#allocation2 + $0x28] sm:$0xff]
    %v329 = vld [vmem:[#allocation2 + $0x30] sm:$0xff]
    %v330 = vld [vmem:[#allocation2 + $0x38] sm:$0xff]
    %v331 = vld [vmem:[#allocation2 + $0x40] sm:$0xff]
    %v332 = vld [vmem:[#allocation2 + $0x48] sm:$0xff]
    %v333 = vld [vmem:[#allocation2 + $0x50] sm:$0xff]
    %v334 = vld [vmem:[#allocation2 + $0x58] sm:$0xff]
    %v335 = vld [vmem:[#allocation2 + $0x60] sm:$0xff]
    %v336 = vld [vmem:[#allocation2 + $0x68] sm:$0xff]
    %v337 = vld [vmem:[#allocation2 + $0x70] sm:$0xff]
    %v338 = vld [vmem:[#allocation2 + $0x78] sm:$0xff]
    %v339 = vpack.c.bf16 %v324, %v323
    %v340 = vpack.c.bf16 %v326, %v325
    %v341 = vpack.c.bf16 %v328, %v327
    %v342 = vpack.c.bf16 %v330, %v329
    %v343 = vpack.c.bf16 %v332, %v331
    %v344 = vpack.c.bf16 %v334, %v333
    %v345 = vpack.c.bf16 %v336, %v335
    %v346 = vpack.c.bf16 %v338, %v337
    %v347 = vld [vmem:[%s3] sm:$0xf]
    %v348 = vld [vmem:[%s3 + $0x4] sm:$0xf]
    %v349 = vld [vmem:[%s3 + $0x8] sm:$0xf]
    %v350 = vld [vmem:[%s3 + $0xc] sm:$0xf]
    %v351 = vld [vmem:[%s3 + $0x10] sm:$0xf]
    %v352 = vld [vmem:[%s3 + $0x14] sm:$0xf]
    %v353 = vld [vmem:[%s3 + $0x18] sm:$0xf]
    %v354 = vld [vmem:[%s3 + $0x1c] sm:$0xf]
    %v355 = vld [vmem:[%s3 + $0x20] sm:$0xf]
    %v356 = vld [vmem:[%s3 + $0x24] sm:$0xf]
    %v357 = vld [vmem:[%s3 + $0x28] sm:$0xf]
    %v358 = vld [vmem:[%s3 + $0x2c] sm:$0xf]
    %v359 = vld [vmem:[%s3 + $0x30] sm:$0xf]
    %v360 = vld [vmem:[%s3 + $0x34] sm:$0xf]
    %v361 = vld [vmem:[%s3 + $0x38] sm:$0xf]
    %v362 = vld [vmem:[%s3 + $0x3c] sm:$0xf]
    %v363 = vld [vmem:[%s2] sm:$0xf]
    %v364 = vld [vmem:[%s2 + $0x4] sm:$0xf]
    %v365 = vld [vmem:[%s2 + $0x8] sm:$0xf]
    %v366 = vld [vmem:[%s2 + $0xc] sm:$0xf]
    %v367 = vld [vmem:[%s2 + $0x10] sm:$0xf]
    %v368 = vld [vmem:[%s2 + $0x14] sm:$0xf]
    %v369 = vld [vmem:[%s2 + $0x18] sm:$0xf]
    %v370 = vld [vmem:[%s2 + $0x1c] sm:$0xf]
    %v371 = vld [vmem:[%s2 + $0x20] sm:$0xf]
    %v372 = vld [vmem:[%s2 + $0x24] sm:$0xf]
    %v373 = vld [vmem:[%s2 + $0x28] sm:$0xf]
    %v374 = vld [vmem:[%s2 + $0x2c] sm:$0xf]
    %v375 = vld [vmem:[%s2 + $0x30] sm:$0xf]
    %v376 = vld [vmem:[%s2 + $0x34] sm:$0xf]
    %v377 = vld [vmem:[%s2 + $0x38] sm:$0xf]
    %v378 = vld [vmem:[%s2 + $0x3c] sm:$0xf]
    %v379 = vld [vmem:[%s4] sm:$0xf]
    %v380 = vld [vmem:[%s4 + $0x4] sm:$0xf]
    %v381 = vld [vmem:[%s4 + $0x8] sm:$0xf]
    %v382 = vld [vmem:[%s4 + $0xc] sm:$0xf]
    %v383 = vld [vmem:[%s4 + $0x10] sm:$0xf]
    %v384 = vld [vmem:[%s4 + $0x14] sm:$0xf]
    %v385 = vld [vmem:[%s4 + $0x18] sm:$0xf]
    %v386 = vld [vmem:[%s4 + $0x1c] sm:$0xf]
    %v387 = vld [vmem:[%s4 + $0x20] sm:$0xf]
    %v388 = vld [vmem:[%s4 + $0x24] sm:$0xf]
    %v389 = vld [vmem:[%s4 + $0x28] sm:$0xf]
    %v390 = vld [vmem:[%s4 + $0x2c] sm:$0xf]
    %v391 = vld [vmem:[%s4 + $0x30] sm:$0xf]
    %v392 = vld [vmem:[%s4 + $0x34] sm:$0xf]
    %v393 = vld [vmem:[%s4 + $0x38] sm:$0xf]
    %v394 = vld [vmem:[%s4 + $0x3c] sm:$0xf]
    %v411 = vunpack.c.l.b16 %v363
    %v412 = vunpack.c.l.b16 %v364
    %v413 = vunpack.c.l.b16 %v365
    %v414 = vunpack.c.l.b16 %v366
    %v415 = vunpack.c.l.b16 %v367
    %v416 = vunpack.c.l.b16 %v368
    %v417 = vunpack.c.l.b16 %v369
    %v418 = vunpack.c.l.b16 %v370
    %v419 = vunpack.c.l.b16 %v371
    %v420 = vunpack.c.l.b16 %v372
    %v421 = vunpack.c.l.b16 %v373
    %v422 = vunpack.c.l.b16 %v374
    %v423 = vunpack.c.l.b16 %v375
    %v424 = vunpack.c.l.b16 %v376
    %v425 = vunpack.c.l.b16 %v377
    %v426 = vunpack.c.l.b16 %v378
    %v427 = vpack.c.b16 %v412, %v411
    %v428 = vpack.c.b16 %v414, %v413
    %v429 = vpack.c.b16 %v416, %v415
    %v430 = vpack.c.b16 %v418, %v417
    %v431 = vpack.c.b16 %v420, %v419
    %v432 = vpack.c.b16 %v422, %v421
    %v433 = vpack.c.b16 %v424, %v423
    %v434 = vpack.c.b16 %v426, %v425
    %v459 = vunpack.c.l.b16 %v379
    %v460 = vunpack.c.l.b16 %v380
    %v461 = vunpack.c.l.b16 %v381
    %v462 = vunpack.c.l.b16 %v382
    %v463 = vunpack.c.l.b16 %v383
    %v464 = vunpack.c.l.b16 %v384
    %v465 = vunpack.c.l.b16 %v385
    %v466 = vunpack.c.l.b16 %v386
    %v467 = vunpack.c.l.b16 %v387
    %v468 = vunpack.c.l.b16 %v388
    %v469 = vunpack.c.l.b16 %v389
    %v470 = vunpack.c.l.b16 %v390
    %v471 = vunpack.c.l.b16 %v391
    %v472 = vunpack.c.l.b16 %v392
    %v473 = vunpack.c.l.b16 %v393
    %v474 = vunpack.c.l.b16 %v394
    %v475 = vpack.c.b16 %v460, %v459
    %v476 = vpack.c.b16 %v462, %v461
    %v477 = vpack.c.b16 %v464, %v463
    %v478 = vpack.c.b16 %v466, %v465
    %v479 = vpack.c.b16 %v468, %v467
    %v480 = vpack.c.b16 %v470, %v469
    %v481 = vpack.c.b16 %v472, %v471
    %v482 = vpack.c.b16 %v474, %v473
    %491 = vmatprep.subr.bf16.mxu0 0
    %492 = vmatpush1.bf16.msra.mxu0 %v482
    %493 = vmatprep.subr.bf16.mxu0 0
    %494 = vmatpush1.bf16.msra.mxu0 %v481
    %495 = vmatprep.subr.bf16.mxu0 0
    %496 = vmatpush1.bf16.msra.mxu0 %v480
    %497 = vmatprep.subr.bf16.mxu0 0
    %498 = vmatpush1.bf16.msra.mxu0 %v479
    %499 = vmatprep.subr.bf16.mxu0 0
    %500 = vmatpush1.bf16.msra.mxu0 %v478
    %501 = vmatprep.subr.bf16.mxu0 0
    %502 = vmatpush1.bf16.msra.mxu0 %v477
    %503 = vmatprep.subr.bf16.mxu0 0
    %504 = vmatpush1.bf16.msra.mxu0 %v476
    %505 = vmatprep.subr.bf16.mxu0 0
    %506 = vmatpush1.bf16.msra.mxu0 %v475
    %507 = vmatprep.subr.bf16.mxu0 0
    %508 = vmatpush2.bf16.msra.mxu0 0
    %509 = vmatprep.subr.bf16.mxu0 0
    %510 = vmatpush2.bf16.msra.mxu0 0
    %511 = vmatprep.subr.bf16.mxu0 0
    %512 = vmatpush2.bf16.msra.mxu0 0
    %513 = vmatprep.subr.bf16.mxu0 0
    %514 = vmatpush2.bf16.msra.mxu0 0
    %515 = vmatprep.subr.bf16.mxu0 0
    %516 = vmatpush2.bf16.msra.mxu0 0
    %517 = vmatprep.subr.bf16.mxu0 0
    %518 = vmatpush2.bf16.msra.mxu0 0
    %519 = vmatprep.subr.bf16.mxu0 0
    %520 = vmatpush2.bf16.msra.mxu0 0
    %521 = vmatprep.subr.bf16.mxu0 0
    %522 = vmatpush2.bf16.msra.mxu0 0
    %523 = vmatprep.mubr.bf16.mxu0 0
    %524 = vmatmul.mubr.bf16.gmra.mxu0 %v427
    %v525 = vpop.f32.mrf.mxu0
    %v526 = vadd.f32 0.0, %v525
    %v527 = vpop.f32.mrf.mxu0
    %v528 = vpop.f32.mrf.mxu0
    %v529 = vadd.f32 0.0, %v528
    %v530 = vpop.f32.mrf.mxu0
    %531 = vmatprep.mubr.bf16.mxu0 0
    %532 = vmatmul.mubr.bf16.gmra.mxu0 %v428
    %v533 = vpop.f32.mrf.mxu0
    %v534 = vadd.f32 0.0, %v533
    %v535 = vpop.f32.mrf.mxu0
    %v536 = vpop.f32.mrf.mxu0
    %v537 = vadd.f32 0.0, %v536
    %v538 = vpop.f32.mrf.mxu0
    %539 = vmatprep.mubr.bf16.mxu0 0
    %540 = vmatmul.mubr.bf16.gmra.mxu0 %v429
    %v541 = vpop.f32.mrf.mxu0
    %v542 = vadd.f32 0.0, %v541
    %v543 = vpop.f32.mrf.mxu0
    %v544 = vpop.f32.mrf.mxu0
    %v545 = vadd.f32 0.0, %v544
    %v546 = vpop.f32.mrf.mxu0
    %547 = vmatprep.mubr.bf16.mxu0 0
    %548 = vmatmul.mubr.bf16.gmra.mxu0 %v430
    %v549 = vpop.f32.mrf.mxu0
    %v550 = vadd.f32 0.0, %v549
    %v551 = vpop.f32.mrf.mxu0
    %v552 = vpop.f32.mrf.mxu0
    %v553 = vadd.f32 0.0, %v552
    %v554 = vpop.f32.mrf.mxu0
    %555 = vmatprep.mubr.bf16.mxu0 0
    %556 = vmatmul.mubr.bf16.gmra.mxu0 %v431
    %v557 = vpop.f32.mrf.mxu0
    %v558 = vadd.f32 0.0, %v557
    %v559 = vpop.f32.mrf.mxu0
    %v560 = vpop.f32.mrf.mxu0
    %v561 = vadd.f32 0.0, %v560
    %v562 = vpop.f32.mrf.mxu0
    %563 = vmatprep.mubr.bf16.mxu0 0
    %564 = vmatmul.mubr.bf16.gmra.mxu0 %v432
    %v565 = vpop.f32.mrf.mxu0
    %v566 = vadd.f32 0.0, %v565
    %v567 = vpop.f32.mrf.mxu0
    %v568 = vpop.f32.mrf.mxu0
    %v569 = vadd.f32 0.0, %v568
    %v570 = vpop.f32.mrf.mxu0
    %571 = vmatprep.mubr.bf16.mxu0 0
    %572 = vmatmul.mubr.bf16.gmra.mxu0 %v433
    %v573 = vpop.f32.mrf.mxu0
    %v574 = vadd.f32 0.0, %v573
    %v575 = vpop.f32.mrf.mxu0
    %v576 = vpop.f32.mrf.mxu0
    %v577 = vadd.f32 0.0, %v576
    %v578 = vpop.f32.mrf.mxu0
    %579 = vmatprep.mubr.bf16.mxu0 0
    %580 = vmatmul.mubr.bf16.gmra.mxu0 %v434
    %v581 = vpop.f32.mrf.mxu0
    %v582 = vadd.f32 0.0, %v581
    %v583 = vpop.f32.mrf.mxu0
    %v584 = vpop.f32.mrf.mxu0
    %v585 = vadd.f32 0.0, %v584
    %v586 = vpop.f32.mrf.mxu0
    %587 = vdwg.mxu0
    %v604 = vunpack.c.l.b16 %v347
    %v605 = vunpack.c.l.b16 %v348
    %v606 = vunpack.c.l.b16 %v349
    %v607 = vunpack.c.l.b16 %v350
    %v608 = vunpack.c.l.b16 %v351
    %v609 = vunpack.c.l.b16 %v352
    %v610 = vunpack.c.l.b16 %v353
    %v611 = vunpack.c.l.b16 %v354
    %v612 = vunpack.c.l.b16 %v355
    %v613 = vunpack.c.l.b16 %v356
    %v614 = vunpack.c.l.b16 %v357
    %v615 = vunpack.c.l.b16 %v358
    %v616 = vunpack.c.l.b16 %v359
    %v617 = vunpack.c.l.b16 %v360
    %v618 = vunpack.c.l.b16 %v361
    %v619 = vunpack.c.l.b16 %v362
    %v620 = vpack.c.b16 %v605, %v604
    %v621 = vpack.c.b16 %v607, %v606
    %v622 = vpack.c.b16 %v609, %v608
    %v623 = vpack.c.b16 %v611, %v610
    %v624 = vpack.c.b16 %v613, %v612
    %v625 = vpack.c.b16 %v615, %v614
    %v626 = vpack.c.b16 %v617, %v616
    %v627 = vpack.c.b16 %v619, %v618
    %636 = vmatprep.subr.bf16.mxu0 0
    %637 = vmatpush1.bf16.msra.mxu0 %v627
    %638 = vmatprep.subr.bf16.mxu0 0
    %639 = vmatpush1.bf16.msra.mxu0 %v626
    %640 = vmatprep.subr.bf16.mxu0 0
    %641 = vmatpush1.bf16.msra.mxu0 %v625
    %642 = vmatprep.subr.bf16.mxu0 0
    %643 = vmatpush1.bf16.msra.mxu0 %v624
    %644 = vmatprep.subr.bf16.mxu0 0
    %645 = vmatpush1.bf16.msra.mxu0 %v623
    %646 = vmatprep.subr.bf16.mxu0 0
    %647 = vmatpush1.bf16.msra.mxu0 %v622
    %648 = vmatprep.subr.bf16.mxu0 0
    %649 = vmatpush1.bf16.msra.mxu0 %v621
    %650 = vmatprep.subr.bf16.mxu0 0
    %651 = vmatpush1.bf16.msra.mxu0 %v620
    %652 = vmatprep.subr.bf16.mxu0 0
    %653 = vmatpush2.bf16.msra.mxu0 0
    %654 = vmatprep.subr.bf16.mxu0 0
    %655 = vmatpush2.bf16.msra.mxu0 0
    %656 = vmatprep.subr.bf16.mxu0 0
    %657 = vmatpush2.bf16.msra.mxu0 0
    %658 = vmatprep.subr.bf16.mxu0 0
    %659 = vmatpush2.bf16.msra.mxu0 0
    %660 = vmatprep.subr.bf16.mxu0 0
    %661 = vmatpush2.bf16.msra.mxu0 0
    %662 = vmatprep.subr.bf16.mxu0 0
    %663 = vmatpush2.bf16.msra.mxu0 0
    %664 = vmatprep.subr.bf16.mxu0 0
    %665 = vmatpush2.bf16.msra.mxu0 0
    %666 = vmatprep.subr.bf16.mxu0 0
    %667 = vmatpush2.bf16.msra.mxu0 0
    %668 = vmatprep.mubr.bf16.mxu0 0
    %669 = vmatmul.mubr.bf16.gmra.mxu0 %v339
    %v670 = vpop.f32.mrf.mxu0
    %v671 = vadd.f32 %v526, %v670
    %v672 = vpop.f32.mrf.mxu0
    %v673 = vpop.f32.mrf.mxu0
    %v674 = vadd.f32 %v529, %v673
    %v675 = vpop.f32.mrf.mxu0
    %676 = vmatprep.mubr.bf16.mxu0 0
    %677 = vmatmul.mubr.bf16.gmra.mxu0 %v340
    %v678 = vpop.f32.mrf.mxu0
    %v679 = vadd.f32 %v534, %v678
    %v680 = vpop.f32.mrf.mxu0
    %v681 = vpop.f32.mrf.mxu0
    %v682 = vadd.f32 %v537, %v681
    %v683 = vpop.f32.mrf.mxu0
    %684 = vmatprep.mubr.bf16.mxu0 0
    %685 = vmatmul.mubr.bf16.gmra.mxu0 %v341
    %v686 = vpop.f32.mrf.mxu0
    %v687 = vadd.f32 %v542, %v686
    %v688 = vpop.f32.mrf.mxu0
    %v689 = vpop.f32.mrf.mxu0
    %v690 = vadd.f32 %v545, %v689
    %v691 = vpop.f32.mrf.mxu0
    %692 = vmatprep.mubr.bf16.mxu0 0
    %693 = vmatmul.mubr.bf16.gmra.mxu0 %v342
    %v694 = vpop.f32.mrf.mxu0
    %v695 = vadd.f32 %v550, %v694
    %v696 = vpop.f32.mrf.mxu0
    %v697 = vpop.f32.mrf.mxu0
    %v698 = vadd.f32 %v553, %v697
    %v699 = vpop.f32.mrf.mxu0
    %700 = vmatprep.mubr.bf16.mxu0 0
    %701 = vmatmul.mubr.bf16.gmra.mxu0 %v343
    %v702 = vpop.f32.mrf.mxu0
    %v703 = vadd.f32 %v558, %v702
    %v704 = vpop.f32.mrf.mxu0
    %v705 = vpop.f32.mrf.mxu0
    %v706 = vadd.f32 %v561, %v705
    %v707 = vpop.f32.mrf.mxu0
    %708 = vmatprep.mubr.bf16.mxu0 0
    %709 = vmatmul.mubr.bf16.gmra.mxu0 %v344
    %v710 = vpop.f32.mrf.mxu0
    %v711 = vadd.f32 %v566, %v710
    %v712 = vpop.f32.mrf.mxu0
    %v713 = vpop.f32.mrf.mxu0
    %v714 = vadd.f32 %v569, %v713
    %v715 = vpop.f32.mrf.mxu0
    %716 = vmatprep.mubr.bf16.mxu0 0
    %717 = vmatmul.mubr.bf16.gmra.mxu0 %v345
    %v718 = vpop.f32.mrf.mxu0
    %v719 = vadd.f32 %v574, %v718
    %v720 = vpop.f32.mrf.mxu0
    %v721 = vpop.f32.mrf.mxu0
    %v722 = vadd.f32 %v577, %v721
    %v723 = vpop.f32.mrf.mxu0
    %724 = vmatprep.mubr.bf16.mxu0 0
    %725 = vmatmul.mubr.bf16.gmra.mxu0 %v346
    %v726 = vpop.f32.mrf.mxu0
    %v727 = vadd.f32 %v582, %v726
    %v728 = vpop.f32.mrf.mxu0
    %v729 = vpop.f32.mrf.mxu0
    %v730 = vadd.f32 %v585, %v729
    %v731 = vpop.f32.mrf.mxu0
    %732 = vdwg.mxu0
    %v733 = vld [vmem:[%s5] sm:$0x1]
    %v735 = vlaneseq
    %v736 = vshrl.u32 %v735, 7
    %v737 = vsub.s32 0, %v736
    %v738 = vrot.slane %v733, %v737
    %v740 = vmul.f32 %v671, %v738
    %v741 = vmul.f32 %v674, %v738
    %v742 = vmul.f32 %v679, %v738
    %v743 = vmul.f32 %v682, %v738
    %v744 = vmul.f32 %v687, %v738
    %v745 = vmul.f32 %v690, %v738
    %v746 = vmul.f32 %v695, %v738
    %v747 = vmul.f32 %v698, %v738
    %v748 = vmul.f32 %v703, %v738
    %v749 = vmul.f32 %v706, %v738
    %v750 = vmul.f32 %v711, %v738
    %v751 = vmul.f32 %v714, %v738
    %v752 = vmul.f32 %v719, %v738
    %v753 = vmul.f32 %v722, %v738
    %v754 = vmul.f32 %v727, %v738
    %v755 = vmul.f32 %v730, %v738
    %v756 = vld [vmem:[%s6] sm:$0x1]
    %v758 = vlaneseq
    %v759 = vshrl.u32 %v758, 7
    %v760 = vsub.s32 0, %v759
    %v761 = vrot.slane %v756, %v760
    %v763 = vadd.f32 %v740, %v761
    %v764 = vadd.f32 %v741, %v761
    %v765 = vadd.f32 %v742, %v761
    %v766 = vadd.f32 %v743, %v761
    %v767 = vadd.f32 %v744, %v761
    %v768 = vadd.f32 %v745, %v761
    %v769 = vadd.f32 %v746, %v761
    %v770 = vadd.f32 %v747, %v761
    %v771 = vadd.f32 %v748, %v761
    %v772 = vadd.f32 %v749, %v761
    %v773 = vadd.f32 %v750, %v761
    %v774 = vadd.f32 %v751, %v761
    %v775 = vadd.f32 %v752, %v761
    %v776 = vadd.f32 %v753, %v761
    %v777 = vadd.f32 %v754, %v761
    %v778 = vadd.f32 %v755, %v761
    %v779 = vmax.f32 %v763, 0.0
    %v780 = vmax.f32 %v764, 0.0
    %v781 = vmax.f32 %v765, 0.0
    %v782 = vmax.f32 %v766, 0.0
    %v783 = vmax.f32 %v767, 0.0
    %v784 = vmax.f32 %v768, 0.0
    %v785 = vmax.f32 %v769, 0.0
    %v786 = vmax.f32 %v770, 0.0
    %v787 = vmax.f32 %v771, 0.0
    %v788 = vmax.f32 %v772, 0.0
    %v789 = vmax.f32 %v773, 0.0
    %v790 = vmax.f32 %v774, 0.0
    %v791 = vmax.f32 %v775, 0.0
    %v792 = vmax.f32 %v776, 0.0
    %v793 = vmax.f32 %v777, 0.0
    %v794 = vmax.f32 %v778, 0.0
    %v795 = vpack.c.bf16 %v780, %v779
    %v796 = vpack.c.bf16 %v782, %v781
    %v797 = vpack.c.bf16 %v784, %v783
    %v798 = vpack.c.bf16 %v786, %v785
    %v799 = vpack.c.bf16 %v788, %v787
    %v800 = vpack.c.bf16 %v790, %v789
    %v801 = vpack.c.bf16 %v792, %v791
    %v802 = vpack.c.bf16 %v794, %v793
    %v811 = vunpack.c.l.b16 %v795
    %v812 = vunpack.c.h.b16 %v795
    %v813 = vunpack.c.l.b16 %v796
    %v814 = vunpack.c.h.b16 %v796
    %v815 = vunpack.c.l.b16 %v797
    %v816 = vunpack.c.h.b16 %v797
    %v817 = vunpack.c.l.b16 %v798
    %v818 = vunpack.c.h.b16 %v798
    %v819 = vunpack.c.l.b16 %v799
    %v820 = vunpack.c.h.b16 %v799
    %v821 = vunpack.c.l.b16 %v800
    %v822 = vunpack.c.h.b16 %v800
    %v823 = vunpack.c.l.b16 %v801
    %v824 = vunpack.c.h.b16 %v801
    %v825 = vunpack.c.l.b16 %v802
    %v826 = vunpack.c.h.b16 %v802
    %v827 = vpack.c.b16 %v811, %v811
    %v828 = vpack.c.b16 %v812, %v812
    %v829 = vpack.c.b16 %v813, %v813
    %v830 = vpack.c.b16 %v814, %v814
    %v831 = vpack.c.b16 %v815, %v815
    %v832 = vpack.c.b16 %v816, %v816
    %v833 = vpack.c.b16 %v817, %v817
    %v834 = vpack.c.b16 %v818, %v818
    %v835 = vpack.c.b16 %v819, %v819
    %v836 = vpack.c.b16 %v820, %v820
    %v837 = vpack.c.b16 %v821, %v821
    %v838 = vpack.c.b16 %v822, %v822
    %v839 = vpack.c.b16 %v823, %v823
    %v840 = vpack.c.b16 %v824, %v824
    %v841 = vpack.c.b16 %v825, %v825
    %v842 = vpack.c.b16 %v826, %v826
    %859 = vst [vmem:[%s7] sm:$0xf] %v827
    %860 = vst [vmem:[%s7 + $0x4] sm:$0xf] %v828
    %861 = vst [vmem:[%s7 + $0x8] sm:$0xf] %v829
    %862 = vst [vmem:[%s7 + $0xc] sm:$0xf] %v830
    %863 = vst [vmem:[%s7 + $0x10] sm:$0xf] %v831
    %864 = vst [vmem:[%s7 + $0x14] sm:$0xf] %v832
    %865 = vst [vmem:[%s7 + $0x18] sm:$0xf] %v833
    %866 = vst [vmem:[%s7 + $0x1c] sm:$0xf] %v834
    %867 = vst [vmem:[%s7 + $0x20] sm:$0xf] %v835
    %868 = vst [vmem:[%s7 + $0x24] sm:$0xf] %v836
    %869 = vst [vmem:[%s7 + $0x28] sm:$0xf] %v837
    %870 = vst [vmem:[%s7 + $0x2c] sm:$0xf] %v838
    %871 = vst [vmem:[%s7 + $0x30] sm:$0xf] %v839
    %872 = vst [vmem:[%s7 + $0x34] sm:$0xf] %v840
    %873 = vst [vmem:[%s7 + $0x38] sm:$0xf] %v841
    %874 = vst [vmem:[%s7 + $0x3c] sm:$0xf] %v842
  $region37: #{sageweight_forward.2} parent=0 // pred_fallthru
    _
  // Predicated region
  $region38: #{sageweight_forward.2} parent=0 // pred_check
    _
  $region39: #{sageweight_forward.2} parent=0 // pred_check_branch
    %876 = sbr.rel (0) target = $region41
  $region40: #{sageweight_forward.2} parent=0 // pred_region
    _
  $region41: #{sageweight_forward.2} parent=0 // pred_fallthru
    _
  // Predicated region
  $region42: #{sageweight_forward.2} parent=0 // pred_check
    _
  $region43: #{sageweight_forward.2} parent=0 // pred_check_branch
    %878 = sbr.rel (0) target = $region45
  $region44: #{sageweight_forward.2} parent=0 // pred_region
    _
  $region45: #{sageweight_forward.2} parent=0 // pred_fallthru
    _

// kernel: sageweight_forward.3
$region0: #{sageweight_forward.3}
  #allocation0 [shape = 'u32[]', space=smem, size = 0x4, offset = 0x4, fixed_abs, tag = 'smem constant byte address 0x4 - core index']
  #allocation1 [shape = 'u32[144,128]{1,0:T(1,128)}', space=vmem, size = 0x12000, scoped, tag = 'internal scratch']
  #allocation2 [shape = 'f32[128,128]{1,0:T(8,128)}', space=vmem, size = 0x10000, scoped, tag = 'scratch operand']
  %s0 = inlined_call_operand.vmem [shape: bf16[128,128], index: 0, kind: input, shape index: {}]
  %s1 = inlined_call_operand.vmem [shape: bf16[128,128], index: 1, kind: input, shape index: {}, may-alias: {1,2}]
  %s2 = inlined_call_operand.vmem [shape: bf16[128,128], index: 2, kind: input, shape index: {}, may-alias: {1,2}]
  %s3 = inlined_call_operand.vmem [shape: bf16[128,128], index: 3, kind: input, shape index: {}]
  %s4 = inlined_call_operand.vmem [shape: bf16[128,128], index: 4, kind: input, shape index: {}]
  %s5 = inlined_call_operand.vmem [shape: f32[1,128], index: 5, kind: input, shape index: {}]
  %s6 = inlined_call_operand.vmem [shape: f32[128,128], index: 6, kind: output, shape index: {0}]
  %s7 = inlined_call_operand.vmem [shape: f32[8,128], index: 7, kind: output, shape index: {1}]
  %8 = xla_tuple %s6, %s7
  %s9 = sld [smem:[#allocation0]]
  $region50: #{sageweight_forward.3} parent=0
    _
  %s11 = ssub.s32 1, %s9
  %s12 = scalar_select 0, %s11, %s9
  // Predicated region
  $region2: #{sageweight_forward.3} parent=0 // pred_check
    _
  $region3: #{sageweight_forward.3} parent=0 // pred_check_branch
    %14 = sbr.rel (0) target = $region5
  $region4: #{sageweight_forward.3} parent=0 // pred_region
    _
  $region5: #{sageweight_forward.3} parent=0 // pred_fallthru
    _
  // Predicated region
  $region6: #{sageweight_forward.3} parent=0 // pred_check
    _
  $region7: #{sageweight_forward.3} parent=0 // pred_check_branch
    %16 = sbr.rel (0) target = $region9
  $region8: #{sageweight_forward.3} parent=0 // pred_region
    _
  $region9: #{sageweight_forward.3} parent=0 // pred_fallthru
    _
  // Predicated region
  $region10: #{sageweight_forward.3} parent=0 // pred_check
    _
  $region11: #{sageweight_forward.3} parent=0 // pred_check_branch
    %18 = sbr.rel (0) target = $region13
  $region12: #{sageweight_forward.3} parent=0 // pred_region
    _
  $region13: #{sageweight_forward.3} parent=0 // pred_fallthru
    _
  // Predicated region
  $region14: #{sageweight_forward.3} parent=0 // pred_check
    _
  $region15: #{sageweight_forward.3} parent=0 // pred_check_branch
    %20 = sbr.rel (0) target = $region17
  $region16: #{sageweight_forward.3} parent=0 // pred_region
    _
  $region17: #{sageweight_forward.3} parent=0 // pred_fallthru
    _
  // Predicated region
  $region18: #{sageweight_forward.3} parent=0 // pred_check
    _
  $region19: #{sageweight_forward.3} parent=0 // pred_check_branch
    %22 = sbr.rel (0) target = $region21
  $region20: #{sageweight_forward.3} parent=0 // pred_region
    _
  $region21: #{sageweight_forward.3} parent=0 // pred_fallthru
    _
  // Predicated region
  $region22: #{sageweight_forward.3} parent=0 // pred_check
    _
  $region23: #{sageweight_forward.3} parent=0 // pred_check_branch
    %24 = sbr.rel (0) target = $region25
  $region24: #{sageweight_forward.3} parent=0 // pred_region
    _
  $region25: #{sageweight_forward.3} parent=0 // pred_fallthru
    _
  %p26 = scmp.eq.s32.totalorder 0, 0
  // Predicated region
  $region26: #{sageweight_forward.3} parent=0 // pred_check
    %p27 = pneg %p26
  $region27: #{sageweight_forward.3} parent=0 // pred_check_branch
    %29 = sbr.rel (%p27) target = $region29
  $region28: #{sageweight_forward.3} parent=0 // pred_region
    %30 = vst [vmem:[#allocation2] sm:$0xff] 0.0
    %31 = vst [vmem:[#allocation2 + $0x8] sm:$0xff] 0.0
    %32 = vst [vmem:[#allocation2 + $0x10] sm:$0xff] 0.0
    %33 = vst [vmem:[#allocation2 + $0x18] sm:$0xff] 0.0
    %34 = vst [vmem:[#allocation2 + $0x20] sm:$0xff] 0.0
    %35 = vst [vmem:[#allocation2 + $0x28] sm:$0xff] 0.0
    %36 = vst [vmem:[#allocation2 + $0x30] sm:$0xff] 0.0
    %37 = vst [vmem:[#allocation2 + $0x38] sm:$0xff] 0.0
    %38 = vst [vmem:[#allocation2 + $0x40] sm:$0xff] 0.0
    %39 = vst [vmem:[#allocation2 + $0x48] sm:$0xff] 0.0
    %40 = vst [vmem:[#allocation2 + $0x50] sm:$0xff] 0.0
    %41 = vst [vmem:[#allocation2 + $0x58] sm:$0xff] 0.0
    %42 = vst [vmem:[#allocation2 + $0x60] sm:$0xff] 0.0
    %43 = vst [vmem:[#allocation2 + $0x68] sm:$0xff] 0.0
    %44 = vst [vmem:[#allocation2 + $0x70] sm:$0xff] 0.0
    %45 = vst [vmem:[#allocation2 + $0x78] sm:$0xff] 0.0
  $region29: #{sageweight_forward.3} parent=0 // pred_fallthru
    _
  %v46 = vld [vmem:[#allocation2] sm:$0xff]
  %v47 = vld [vmem:[#allocation2 + $0x8] sm:$0xff]
  %v48 = vld [vmem:[#allocation2 + $0x10] sm:$0xff]
  %v49 = vld [vmem:[#allocation2 + $0x18] sm:$0xff]
  %v50 = vld [vmem:[#allocation2 + $0x20] sm:$0xff]
  %v51 = vld [vmem:[#allocation2 + $0x28] sm:$0xff]
  %v52 = vld [vmem:[#allocation2 + $0x30] sm:$0xff]
  %v53 = vld [vmem:[#allocation2 + $0x38] sm:$0xff]
  %v54 = vld [vmem:[#allocation2 + $0x40] sm:$0xff]
  %v55 = vld [vmem:[#allocation2 + $0x48] sm:$0xff]
  %v56 = vld [vmem:[#allocation2 + $0x50] sm:$0xff]
  %v57 = vld [vmem:[#allocation2 + $0x58] sm:$0xff]
  %v58 = vld [vmem:[#allocation2 + $0x60] sm:$0xff]
  %v59 = vld [vmem:[#allocation2 + $0x68] sm:$0xff]
  %v60 = vld [vmem:[#allocation2 + $0x70] sm:$0xff]
  %v61 = vld [vmem:[#allocation2 + $0x78] sm:$0xff]
  %v62 = vld [vmem:[%s0] sm:$0xf]
  %v63 = vld [vmem:[%s0 + $0x4] sm:$0xf]
  %v64 = vld [vmem:[%s0 + $0x8] sm:$0xf]
  %v65 = vld [vmem:[%s0 + $0xc] sm:$0xf]
  %v66 = vld [vmem:[%s0 + $0x10] sm:$0xf]
  %v67 = vld [vmem:[%s0 + $0x14] sm:$0xf]
  %v68 = vld [vmem:[%s0 + $0x18] sm:$0xf]
  %v69 = vld [vmem:[%s0 + $0x1c] sm:$0xf]
  %v70 = vld [vmem:[%s0 + $0x20] sm:$0xf]
  %v71 = vld [vmem:[%s0 + $0x24] sm:$0xf]
  %v72 = vld [vmem:[%s0 + $0x28] sm:$0xf]
  %v73 = vld [vmem:[%s0 + $0x2c] sm:$0xf]
  %v74 = vld [vmem:[%s0 + $0x30] sm:$0xf]
  %v75 = vld [vmem:[%s0 + $0x34] sm:$0xf]
  %v76 = vld [vmem:[%s0 + $0x38] sm:$0xf]
  %v77 = vld [vmem:[%s0 + $0x3c] sm:$0xf]
  %v78 = vld [vmem:[%s1] sm:$0xf]
  %v79 = vld [vmem:[%s1 + $0x4] sm:$0xf]
  %v80 = vld [vmem:[%s1 + $0x8] sm:$0xf]
  %v81 = vld [vmem:[%s1 + $0xc] sm:$0xf]
  %v82 = vld [vmem:[%s1 + $0x10] sm:$0xf]
  %v83 = vld [vmem:[%s1 + $0x14] sm:$0xf]
  %v84 = vld [vmem:[%s1 + $0x18] sm:$0xf]
  %v85 = vld [vmem:[%s1 + $0x1c] sm:$0xf]
  %v86 = vld [vmem:[%s1 + $0x20] sm:$0xf]
  %v87 = vld [vmem:[%s1 + $0x24] sm:$0xf]
  %v88 = vld [vmem:[%s1 + $0x28] sm:$0xf]
  %v89 = vld [vmem:[%s1 + $0x2c] sm:$0xf]
  %v90 = vld [vmem:[%s1 + $0x30] sm:$0xf]
  %v91 = vld [vmem:[%s1 + $0x34] sm:$0xf]
  %v92 = vld [vmem:[%s1 + $0x38] sm:$0xf]
  %v93 = vld [vmem:[%s1 + $0x3c] sm:$0xf]
  %v110 = vunpack.c.l.b16 %v62
  %v111 = vunpack.c.l.b16 %v63
  %v112 = vunpack.c.l.b16 %v64
  %v113 = vunpack.c.l.b16 %v65
  %v114 = vunpack.c.l.b16 %v66
  %v115 = vunpack.c.l.b16 %v67
  %v116 = vunpack.c.l.b16 %v68
  %v117 = vunpack.c.l.b16 %v69
  %v118 = vunpack.c.l.b16 %v70
  %v119 = vunpack.c.l.b16 %v71
  %v120 = vunpack.c.l.b16 %v72
  %v121 = vunpack.c.l.b16 %v73
  %v122 = vunpack.c.l.b16 %v74
  %v123 = vunpack.c.l.b16 %v75
  %v124 = vunpack.c.l.b16 %v76
  %v125 = vunpack.c.l.b16 %v77
  %v126 = vpack.c.b16 %v111, %v110
  %v127 = vpack.c.b16 %v113, %v112
  %v128 = vpack.c.b16 %v115, %v114
  %v129 = vpack.c.b16 %v117, %v116
  %v130 = vpack.c.b16 %v119, %v118
  %v131 = vpack.c.b16 %v121, %v120
  %v132 = vpack.c.b16 %v123, %v122
  %v133 = vpack.c.b16 %v125, %v124
  %v158 = vunpack.c.l.b16 %v78
  %v159 = vunpack.c.l.b16 %v79
  %v160 = vunpack.c.l.b16 %v80
  %v161 = vunpack.c.l.b16 %v81
  %v162 = vunpack.c.l.b16 %v82
  %v163 = vunpack.c.l.b16 %v83
  %v164 = vunpack.c.l.b16 %v84
  %v165 = vunpack.c.l.b16 %v85
  %v166 = vunpack.c.l.b16 %v86
  %v167 = vunpack.c.l.b16 %v87
  %v168 = vunpack.c.l.b16 %v88
  %v169 = vunpack.c.l.b16 %v89
  %v170 = vunpack.c.l.b16 %v90
  %v171 = vunpack.c.l.b16 %v91
  %v172 = vunpack.c.l.b16 %v92
  %v173 = vunpack.c.l.b16 %v93
  %v174 = vpack.c.b16 %v159, %v158
  %v175 = vpack.c.b16 %v161, %v160
  %v176 = vpack.c.b16 %v163, %v162
  %v177 = vpack.c.b16 %v165, %v164
  %v178 = vpack.c.b16 %v167, %v166
  %v179 = vpack.c.b16 %v169, %v168
  %v180 = vpack.c.b16 %v171, %v170
  %v181 = vpack.c.b16 %v173, %v172
  %190 = vmatprep.subr.bf16.mxu0 0
  %191 = vmatpush1.bf16.msra.mxu0 %v181
  %192 = vmatprep.subr.bf16.mxu0 0
  %193 = vmatpush1.bf16.msra.mxu0 %v180
  %194 = vmatprep.subr.bf16.mxu0 0
  %195 = vmatpush1.bf16.msra.mxu0 %v179
  %196 = vmatprep.subr.bf16.mxu0 0
  %197 = vmatpush1.bf16.msra.mxu0 %v178
  %198 = vmatprep.subr.bf16.mxu0 0
  %199 = vmatpush1.bf16.msra.mxu0 %v177
  %200 = vmatprep.subr.bf16.mxu0 0
  %201 = vmatpush1.bf16.msra.mxu0 %v176
  %202 = vmatprep.subr.bf16.mxu0 0
  %203 = vmatpush1.bf16.msra.mxu0 %v175
  %204 = vmatprep.subr.bf16.mxu0 0
  %205 = vmatpush1.bf16.msra.mxu0 %v174
  %206 = vmatprep.subr.bf16.mxu0 0
  %207 = vmatpush2.bf16.msra.mxu0 0
  %208 = vmatprep.subr.bf16.mxu0 0
  %209 = vmatpush2.bf16.msra.mxu0 0
  %210 = vmatprep.subr.bf16.mxu0 0
  %211 = vmatpush2.bf16.msra.mxu0 0
  %212 = vmatprep.subr.bf16.mxu0 0
  %213 = vmatpush2.bf16.msra.mxu0 0
  %214 = vmatprep.subr.bf16.mxu0 0
  %215 = vmatpush2.bf16.msra.mxu0 0
  %216 = vmatprep.subr.bf16.mxu0 0
  %217 = vmatpush2.bf16.msra.mxu0 0
  %218 = vmatprep.subr.bf16.mxu0 0
  %219 = vmatpush2.bf16.msra.mxu0 0
  %220 = vmatprep.subr.bf16.mxu0 0
  %221 = vmatpush2.bf16.msra.mxu0 0
  %222 = vmatprep.mubr.bf16.mxu0 0
  %223 = vmatmul.mubr.bf16.gmra.mxu0 %v126
  %v224 = vpop.f32.mrf.mxu0
  %v225 = vadd.f32 0.0, %v224
  %v226 = vpop.f32.mrf.mxu0
  %v227 = vpop.f32.mrf.mxu0
  %v228 = vadd.f32 0.0, %v227
  %v229 = vpop.f32.mrf.mxu0
  %230 = vmatprep.mubr.bf16.mxu0 0
  %231 = vmatmul.mubr.bf16.gmra.mxu0 %v127
  %v232 = vpop.f32.mrf.mxu0
  %v233 = vadd.f32 0.0, %v232
  %v234 = vpop.f32.mrf.mxu0
  %v235 = vpop.f32.mrf.mxu0
  %v236 = vadd.f32 0.0, %v235
  %v237 = vpop.f32.mrf.mxu0
  %238 = vmatprep.mubr.bf16.mxu0 0
  %239 = vmatmul.mubr.bf16.gmra.mxu0 %v128
  %v240 = vpop.f32.mrf.mxu0
  %v241 = vadd.f32 0.0, %v240
  %v242 = vpop.f32.mrf.mxu0
  %v243 = vpop.f32.mrf.mxu0
  %v244 = vadd.f32 0.0, %v243
  %v245 = vpop.f32.mrf.mxu0
  %246 = vmatprep.mubr.bf16.mxu0 0
  %247 = vmatmul.mubr.bf16.gmra.mxu0 %v129
  %v248 = vpop.f32.mrf.mxu0
  %v249 = vadd.f32 0.0, %v248
  %v250 = vpop.f32.mrf.mxu0
  %v251 = vpop.f32.mrf.mxu0
  %v252 = vadd.f32 0.0, %v251
  %v253 = vpop.f32.mrf.mxu0
  %254 = vmatprep.mubr.bf16.mxu0 0
  %255 = vmatmul.mubr.bf16.gmra.mxu0 %v130
  %v256 = vpop.f32.mrf.mxu0
  %v257 = vadd.f32 0.0, %v256
  %v258 = vpop.f32.mrf.mxu0
  %v259 = vpop.f32.mrf.mxu0
  %v260 = vadd.f32 0.0, %v259
  %v261 = vpop.f32.mrf.mxu0
  %262 = vmatprep.mubr.bf16.mxu0 0
  %263 = vmatmul.mubr.bf16.gmra.mxu0 %v131
  %v264 = vpop.f32.mrf.mxu0
  %v265 = vadd.f32 0.0, %v264
  %v266 = vpop.f32.mrf.mxu0
  %v267 = vpop.f32.mrf.mxu0
  %v268 = vadd.f32 0.0, %v267
  %v269 = vpop.f32.mrf.mxu0
  %270 = vmatprep.mubr.bf16.mxu0 0
  %271 = vmatmul.mubr.bf16.gmra.mxu0 %v132
  %v272 = vpop.f32.mrf.mxu0
  %v273 = vadd.f32 0.0, %v272
  %v274 = vpop.f32.mrf.mxu0
  %v275 = vpop.f32.mrf.mxu0
  %v276 = vadd.f32 0.0, %v275
  %v277 = vpop.f32.mrf.mxu0
  %278 = vmatprep.mubr.bf16.mxu0 0
  %279 = vmatmul.mubr.bf16.gmra.mxu0 %v133
  %v280 = vpop.f32.mrf.mxu0
  %v281 = vadd.f32 0.0, %v280
  %v282 = vpop.f32.mrf.mxu0
  %v283 = vpop.f32.mrf.mxu0
  %v284 = vadd.f32 0.0, %v283
  %v285 = vpop.f32.mrf.mxu0
  %286 = vdwg.mxu0
  %v287 = vadd.f32 %v46, %v225
  %v288 = vadd.f32 %v47, %v228
  %v289 = vadd.f32 %v48, %v233
  %v290 = vadd.f32 %v49, %v236
  %v291 = vadd.f32 %v50, %v241
  %v292 = vadd.f32 %v51, %v244
  %v293 = vadd.f32 %v52, %v249
  %v294 = vadd.f32 %v53, %v252
  %v295 = vadd.f32 %v54, %v257
  %v296 = vadd.f32 %v55, %v260
  %v297 = vadd.f32 %v56, %v265
  %v298 = vadd.f32 %v57, %v268
  %v299 = vadd.f32 %v58, %v273
  %v300 = vadd.f32 %v59, %v276
  %v301 = vadd.f32 %v60, %v281
  %v302 = vadd.f32 %v61, %v284
  %303 = vst [vmem:[#allocation2] sm:$0xff] %v287
  %304 = vst [vmem:[#allocation2 + $0x8] sm:$0xff] %v288
  %305 = vst [vmem:[#allocation2 + $0x10] sm:$0xff] %v289
  %306 = vst [vmem:[#allocation2 + $0x18] sm:$0xff] %v290
  %307 = vst [vmem:[#allocation2 + $0x20] sm:$0xff] %v291
  %308 = vst [vmem:[#allocation2 + $0x28] sm:$0xff] %v292
  %309 = vst [vmem:[#allocation2 + $0x30] sm:$0xff] %v293
  %310 = vst [vmem:[#allocation2 + $0x38] sm:$0xff] %v294
  %311 = vst [vmem:[#allocation2 + $0x40] sm:$0xff] %v295
  %312 = vst [vmem:[#allocation2 + $0x48] sm:$0xff] %v296
  %313 = vst [vmem:[#allocation2 + $0x50] sm:$0xff] %v297
  %314 = vst [vmem:[#allocation2 + $0x58] sm:$0xff] %v298
  %315 = vst [vmem:[#allocation2 + $0x60] sm:$0xff] %v299
  %316 = vst [vmem:[#allocation2 + $0x68] sm:$0xff] %v300
  %317 = vst [vmem:[#allocation2 + $0x70] sm:$0xff] %v301
  %318 = vst [vmem:[#allocation2 + $0x78] sm:$0xff] %v302
  // Predicated region
  $region30: #{sageweight_forward.3} parent=0 // pred_check
    %p319 = pneg %p26
  $region31: #{sageweight_forward.3} parent=0 // pred_check_branch
    %321 = sbr.rel (%p319) target = $region33
  $region32: #{sageweight_forward.3} parent=0 // pred_region
    %v322 = vld [vmem:[#allocation2] sm:$0xff]
    %v323 = vld [vmem:[#allocation2 + $0x8] sm:$0xff]
    %v324 = vld [vmem:[#allocation2 + $0x10] sm:$0xff]
    %v325 = vld [vmem:[#allocation2 + $0x18] sm:$0xff]
    %v326 = vld [vmem:[#allocation2 + $0x20] sm:$0xff]
    %v327 = vld [vmem:[#allocation2 + $0x28] sm:$0xff]
    %v328 = vld [vmem:[#allocation2 + $0x30] sm:$0xff]
    %v329 = vld [vmem:[#allocation2 + $0x38] sm:$0xff]
    %v330 = vld [vmem:[#allocation2 + $0x40] sm:$0xff]
    %v331 = vld [vmem:[#allocation2 + $0x48] sm:$0xff]
    %v332 = vld [vmem:[#allocation2 + $0x50] sm:$0xff]
    %v333 = vld [vmem:[#allocation2 + $0x58] sm:$0xff]
    %v334 = vld [vmem:[#allocation2 + $0x60] sm:$0xff]
    %v335 = vld [vmem:[#allocation2 + $0x68] sm:$0xff]
    %v336 = vld [vmem:[#allocation2 + $0x70] sm:$0xff]
    %v337 = vld [vmem:[#allocation2 + $0x78] sm:$0xff]
    %v338 = vpack.c.bf16 %v323, %v322
    %v339 = vpack.c.bf16 %v325, %v324
    %v340 = vpack.c.bf16 %v327, %v326
    %v341 = vpack.c.bf16 %v329, %v328
    %v342 = vpack.c.bf16 %v331, %v330
    %v343 = vpack.c.bf16 %v333, %v332
    %v344 = vpack.c.bf16 %v335, %v334
    %v345 = vpack.c.bf16 %v337, %v336
    %v346 = vld [vmem:[%s3] sm:$0xf]
    %v347 = vld [vmem:[%s3 + $0x4] sm:$0xf]
    %v348 = vld [vmem:[%s3 + $0x8] sm:$0xf]
    %v349 = vld [vmem:[%s3 + $0xc] sm:$0xf]
    %v350 = vld [vmem:[%s3 + $0x10] sm:$0xf]
    %v351 = vld [vmem:[%s3 + $0x14] sm:$0xf]
    %v352 = vld [vmem:[%s3 + $0x18] sm:$0xf]
    %v353 = vld [vmem:[%s3 + $0x1c] sm:$0xf]
    %v354 = vld [vmem:[%s3 + $0x20] sm:$0xf]
    %v355 = vld [vmem:[%s3 + $0x24] sm:$0xf]
    %v356 = vld [vmem:[%s3 + $0x28] sm:$0xf]
    %v357 = vld [vmem:[%s3 + $0x2c] sm:$0xf]
    %v358 = vld [vmem:[%s3 + $0x30] sm:$0xf]
    %v359 = vld [vmem:[%s3 + $0x34] sm:$0xf]
    %v360 = vld [vmem:[%s3 + $0x38] sm:$0xf]
    %v361 = vld [vmem:[%s3 + $0x3c] sm:$0xf]
    %v362 = vld [vmem:[%s2] sm:$0xf]
    %v363 = vld [vmem:[%s2 + $0x4] sm:$0xf]
    %v364 = vld [vmem:[%s2 + $0x8] sm:$0xf]
    %v365 = vld [vmem:[%s2 + $0xc] sm:$0xf]
    %v366 = vld [vmem:[%s2 + $0x10] sm:$0xf]
    %v367 = vld [vmem:[%s2 + $0x14] sm:$0xf]
    %v368 = vld [vmem:[%s2 + $0x18] sm:$0xf]
    %v369 = vld [vmem:[%s2 + $0x1c] sm:$0xf]
    %v370 = vld [vmem:[%s2 + $0x20] sm:$0xf]
    %v371 = vld [vmem:[%s2 + $0x24] sm:$0xf]
    %v372 = vld [vmem:[%s2 + $0x28] sm:$0xf]
    %v373 = vld [vmem:[%s2 + $0x2c] sm:$0xf]
    %v374 = vld [vmem:[%s2 + $0x30] sm:$0xf]
    %v375 = vld [vmem:[%s2 + $0x34] sm:$0xf]
    %v376 = vld [vmem:[%s2 + $0x38] sm:$0xf]
    %v377 = vld [vmem:[%s2 + $0x3c] sm:$0xf]
    %v378 = vld [vmem:[%s4] sm:$0xf]
    %v379 = vld [vmem:[%s4 + $0x4] sm:$0xf]
    %v380 = vld [vmem:[%s4 + $0x8] sm:$0xf]
    %v381 = vld [vmem:[%s4 + $0xc] sm:$0xf]
    %v382 = vld [vmem:[%s4 + $0x10] sm:$0xf]
    %v383 = vld [vmem:[%s4 + $0x14] sm:$0xf]
    %v384 = vld [vmem:[%s4 + $0x18] sm:$0xf]
    %v385 = vld [vmem:[%s4 + $0x1c] sm:$0xf]
    %v386 = vld [vmem:[%s4 + $0x20] sm:$0xf]
    %v387 = vld [vmem:[%s4 + $0x24] sm:$0xf]
    %v388 = vld [vmem:[%s4 + $0x28] sm:$0xf]
    %v389 = vld [vmem:[%s4 + $0x2c] sm:$0xf]
    %v390 = vld [vmem:[%s4 + $0x30] sm:$0xf]
    %v391 = vld [vmem:[%s4 + $0x34] sm:$0xf]
    %v392 = vld [vmem:[%s4 + $0x38] sm:$0xf]
    %v393 = vld [vmem:[%s4 + $0x3c] sm:$0xf]
    %v410 = vunpack.c.l.b16 %v362
    %v411 = vunpack.c.l.b16 %v363
    %v412 = vunpack.c.l.b16 %v364
    %v413 = vunpack.c.l.b16 %v365
    %v414 = vunpack.c.l.b16 %v366
    %v415 = vunpack.c.l.b16 %v367
    %v416 = vunpack.c.l.b16 %v368
    %v417 = vunpack.c.l.b16 %v369
    %v418 = vunpack.c.l.b16 %v370
    %v419 = vunpack.c.l.b16 %v371
    %v420 = vunpack.c.l.b16 %v372
    %v421 = vunpack.c.l.b16 %v373
    %v422 = vunpack.c.l.b16 %v374
    %v423 = vunpack.c.l.b16 %v375
    %v424 = vunpack.c.l.b16 %v376
    %v425 = vunpack.c.l.b16 %v377
    %v426 = vpack.c.b16 %v411, %v410
    %v427 = vpack.c.b16 %v413, %v412
    %v428 = vpack.c.b16 %v415, %v414
    %v429 = vpack.c.b16 %v417, %v416
    %v430 = vpack.c.b16 %v419, %v418
    %v431 = vpack.c.b16 %v421, %v420
    %v432 = vpack.c.b16 %v423, %v422
    %v433 = vpack.c.b16 %v425, %v424
    %v458 = vunpack.c.l.b16 %v378
    %v459 = vunpack.c.l.b16 %v379
    %v460 = vunpack.c.l.b16 %v380
    %v461 = vunpack.c.l.b16 %v381
    %v462 = vunpack.c.l.b16 %v382
    %v463 = vunpack.c.l.b16 %v383
    %v464 = vunpack.c.l.b16 %v384
    %v465 = vunpack.c.l.b16 %v385
    %v466 = vunpack.c.l.b16 %v386
    %v467 = vunpack.c.l.b16 %v387
    %v468 = vunpack.c.l.b16 %v388
    %v469 = vunpack.c.l.b16 %v389
    %v470 = vunpack.c.l.b16 %v390
    %v471 = vunpack.c.l.b16 %v391
    %v472 = vunpack.c.l.b16 %v392
    %v473 = vunpack.c.l.b16 %v393
    %v474 = vpack.c.b16 %v459, %v458
    %v475 = vpack.c.b16 %v461, %v460
    %v476 = vpack.c.b16 %v463, %v462
    %v477 = vpack.c.b16 %v465, %v464
    %v478 = vpack.c.b16 %v467, %v466
    %v479 = vpack.c.b16 %v469, %v468
    %v480 = vpack.c.b16 %v471, %v470
    %v481 = vpack.c.b16 %v473, %v472
    %490 = vmatprep.subr.bf16.mxu0 0
    %491 = vmatpush1.bf16.msra.mxu0 %v481
    %492 = vmatprep.subr.bf16.mxu0 0
    %493 = vmatpush1.bf16.msra.mxu0 %v480
    %494 = vmatprep.subr.bf16.mxu0 0
    %495 = vmatpush1.bf16.msra.mxu0 %v479
    %496 = vmatprep.subr.bf16.mxu0 0
    %497 = vmatpush1.bf16.msra.mxu0 %v478
    %498 = vmatprep.subr.bf16.mxu0 0
    %499 = vmatpush1.bf16.msra.mxu0 %v477
    %500 = vmatprep.subr.bf16.mxu0 0
    %501 = vmatpush1.bf16.msra.mxu0 %v476
    %502 = vmatprep.subr.bf16.mxu0 0
    %503 = vmatpush1.bf16.msra.mxu0 %v475
    %504 = vmatprep.subr.bf16.mxu0 0
    %505 = vmatpush1.bf16.msra.mxu0 %v474
    %506 = vmatprep.subr.bf16.mxu0 0
    %507 = vmatpush2.bf16.msra.mxu0 0
    %508 = vmatprep.subr.bf16.mxu0 0
    %509 = vmatpush2.bf16.msra.mxu0 0
    %510 = vmatprep.subr.bf16.mxu0 0
    %511 = vmatpush2.bf16.msra.mxu0 0
    %512 = vmatprep.subr.bf16.mxu0 0
    %513 = vmatpush2.bf16.msra.mxu0 0
    %514 = vmatprep.subr.bf16.mxu0 0
    %515 = vmatpush2.bf16.msra.mxu0 0
    %516 = vmatprep.subr.bf16.mxu0 0
    %517 = vmatpush2.bf16.msra.mxu0 0
    %518 = vmatprep.subr.bf16.mxu0 0
    %519 = vmatpush2.bf16.msra.mxu0 0
    %520 = vmatprep.subr.bf16.mxu0 0
    %521 = vmatpush2.bf16.msra.mxu0 0
    %522 = vmatprep.mubr.bf16.mxu0 0
    %523 = vmatmul.mubr.bf16.gmra.mxu0 %v426
    %v524 = vpop.f32.mrf.mxu0
    %v525 = vadd.f32 0.0, %v524
    %v526 = vpop.f32.mrf.mxu0
    %v527 = vpop.f32.mrf.mxu0
    %v528 = vadd.f32 0.0, %v527
    %v529 = vpop.f32.mrf.mxu0
    %530 = vmatprep.mubr.bf16.mxu0 0
    %531 = vmatmul.mubr.bf16.gmra.mxu0 %v427
    %v532 = vpop.f32.mrf.mxu0
    %v533 = vadd.f32 0.0, %v532
    %v534 = vpop.f32.mrf.mxu0
    %v535 = vpop.f32.mrf.mxu0
    %v536 = vadd.f32 0.0, %v535
    %v537 = vpop.f32.mrf.mxu0
    %538 = vmatprep.mubr.bf16.mxu0 0
    %539 = vmatmul.mubr.bf16.gmra.mxu0 %v428
    %v540 = vpop.f32.mrf.mxu0
    %v541 = vadd.f32 0.0, %v540
    %v542 = vpop.f32.mrf.mxu0
    %v543 = vpop.f32.mrf.mxu0
    %v544 = vadd.f32 0.0, %v543
    %v545 = vpop.f32.mrf.mxu0
    %546 = vmatprep.mubr.bf16.mxu0 0
    %547 = vmatmul.mubr.bf16.gmra.mxu0 %v429
    %v548 = vpop.f32.mrf.mxu0
    %v549 = vadd.f32 0.0, %v548
    %v550 = vpop.f32.mrf.mxu0
    %v551 = vpop.f32.mrf.mxu0
    %v552 = vadd.f32 0.0, %v551
    %v553 = vpop.f32.mrf.mxu0
    %554 = vmatprep.mubr.bf16.mxu0 0
    %555 = vmatmul.mubr.bf16.gmra.mxu0 %v430
    %v556 = vpop.f32.mrf.mxu0
    %v557 = vadd.f32 0.0, %v556
    %v558 = vpop.f32.mrf.mxu0
    %v559 = vpop.f32.mrf.mxu0
    %v560 = vadd.f32 0.0, %v559
    %v561 = vpop.f32.mrf.mxu0
    %562 = vmatprep.mubr.bf16.mxu0 0
    %563 = vmatmul.mubr.bf16.gmra.mxu0 %v431
    %v564 = vpop.f32.mrf.mxu0
    %v565 = vadd.f32 0.0, %v564
    %v566 = vpop.f32.mrf.mxu0
    %v567 = vpop.f32.mrf.mxu0
    %v568 = vadd.f32 0.0, %v567
    %v569 = vpop.f32.mrf.mxu0
    %570 = vmatprep.mubr.bf16.mxu0 0
    %571 = vmatmul.mubr.bf16.gmra.mxu0 %v432
    %v572 = vpop.f32.mrf.mxu0
    %v573 = vadd.f32 0.0, %v572
    %v574 = vpop.f32.mrf.mxu0
    %v575 = vpop.f32.mrf.mxu0
    %v576 = vadd.f32 0.0, %v575
    %v577 = vpop.f32.mrf.mxu0
    %578 = vmatprep.mubr.bf16.mxu0 0
    %579 = vmatmul.mubr.bf16.gmra.mxu0 %v433
    %v580 = vpop.f32.mrf.mxu0
    %v581 = vadd.f32 0.0, %v580
    %v582 = vpop.f32.mrf.mxu0
    %v583 = vpop.f32.mrf.mxu0
    %v584 = vadd.f32 0.0, %v583
    %v585 = vpop.f32.mrf.mxu0
    %586 = vdwg.mxu0
    %v603 = vunpack.c.l.b16 %v346
    %v604 = vunpack.c.l.b16 %v347
    %v605 = vunpack.c.l.b16 %v348
    %v606 = vunpack.c.l.b16 %v349
    %v607 = vunpack.c.l.b16 %v350
    %v608 = vunpack.c.l.b16 %v351
    %v609 = vunpack.c.l.b16 %v352
    %v610 = vunpack.c.l.b16 %v353
    %v611 = vunpack.c.l.b16 %v354
    %v612 = vunpack.c.l.b16 %v355
    %v613 = vunpack.c.l.b16 %v356
    %v614 = vunpack.c.l.b16 %v357
    %v615 = vunpack.c.l.b16 %v358
    %v616 = vunpack.c.l.b16 %v359
    %v617 = vunpack.c.l.b16 %v360
    %v618 = vunpack.c.l.b16 %v361
    %v619 = vpack.c.b16 %v604, %v603
    %v620 = vpack.c.b16 %v606, %v605
    %v621 = vpack.c.b16 %v608, %v607
    %v622 = vpack.c.b16 %v610, %v609
    %v623 = vpack.c.b16 %v612, %v611
    %v624 = vpack.c.b16 %v614, %v613
    %v625 = vpack.c.b16 %v616, %v615
    %v626 = vpack.c.b16 %v618, %v617
    %635 = vmatprep.subr.bf16.mxu0 0
    %636 = vmatpush1.bf16.msra.mxu0 %v626
    %637 = vmatprep.subr.bf16.mxu0 0
    %638 = vmatpush1.bf16.msra.mxu0 %v625
    %639 = vmatprep.subr.bf16.mxu0 0
    %640 = vmatpush1.bf16.msra.mxu0 %v624
    %641 = vmatprep.subr.bf16.mxu0 0
    %642 = vmatpush1.bf16.msra.mxu0 %v623
    %643 = vmatprep.subr.bf16.mxu0 0
    %644 = vmatpush1.bf16.msra.mxu0 %v622
    %645 = vmatprep.subr.bf16.mxu0 0
    %646 = vmatpush1.bf16.msra.mxu0 %v621
    %647 = vmatprep.subr.bf16.mxu0 0
    %648 = vmatpush1.bf16.msra.mxu0 %v620
    %649 = vmatprep.subr.bf16.mxu0 0
    %650 = vmatpush1.bf16.msra.mxu0 %v619
    %651 = vmatprep.subr.bf16.mxu0 0
    %652 = vmatpush2.bf16.msra.mxu0 0
    %653 = vmatprep.subr.bf16.mxu0 0
    %654 = vmatpush2.bf16.msra.mxu0 0
    %655 = vmatprep.subr.bf16.mxu0 0
    %656 = vmatpush2.bf16.msra.mxu0 0
    %657 = vmatprep.subr.bf16.mxu0 0
    %658 = vmatpush2.bf16.msra.mxu0 0
    %659 = vmatprep.subr.bf16.mxu0 0
    %660 = vmatpush2.bf16.msra.mxu0 0
    %661 = vmatprep.subr.bf16.mxu0 0
    %662 = vmatpush2.bf16.msra.mxu0 0
    %663 = vmatprep.subr.bf16.mxu0 0
    %664 = vmatpush2.bf16.msra.mxu0 0
    %665 = vmatprep.subr.bf16.mxu0 0
    %666 = vmatpush2.bf16.msra.mxu0 0
    %667 = vmatprep.mubr.bf16.mxu0 0
    %668 = vmatmul.mubr.bf16.gmra.mxu0 %v338
    %v669 = vpop.f32.mrf.mxu0
    %v670 = vadd.f32 %v525, %v669
    %v671 = vpop.f32.mrf.mxu0
    %v672 = vpop.f32.mrf.mxu0
    %v673 = vadd.f32 %v528, %v672
    %v674 = vpop.f32.mrf.mxu0
    %675 = vmatprep.mubr.bf16.mxu0 0
    %676 = vmatmul.mubr.bf16.gmra.mxu0 %v339
    %v677 = vpop.f32.mrf.mxu0
    %v678 = vadd.f32 %v533, %v677
    %v679 = vpop.f32.mrf.mxu0
    %v680 = vpop.f32.mrf.mxu0
    %v681 = vadd.f32 %v536, %v680
    %v682 = vpop.f32.mrf.mxu0
    %683 = vmatprep.mubr.bf16.mxu0 0
    %684 = vmatmul.mubr.bf16.gmra.mxu0 %v340
    %v685 = vpop.f32.mrf.mxu0
    %v686 = vadd.f32 %v541, %v685
    %v687 = vpop.f32.mrf.mxu0
    %v688 = vpop.f32.mrf.mxu0
    %v689 = vadd.f32 %v544, %v688
    %v690 = vpop.f32.mrf.mxu0
    %691 = vmatprep.mubr.bf16.mxu0 0
    %692 = vmatmul.mubr.bf16.gmra.mxu0 %v341
    %v693 = vpop.f32.mrf.mxu0
    %v694 = vadd.f32 %v549, %v693
    %v695 = vpop.f32.mrf.mxu0
    %v696 = vpop.f32.mrf.mxu0
    %v697 = vadd.f32 %v552, %v696
    %v698 = vpop.f32.mrf.mxu0
    %699 = vmatprep.mubr.bf16.mxu0 0
    %700 = vmatmul.mubr.bf16.gmra.mxu0 %v342
    %v701 = vpop.f32.mrf.mxu0
    %v702 = vadd.f32 %v557, %v701
    %v703 = vpop.f32.mrf.mxu0
    %v704 = vpop.f32.mrf.mxu0
    %v705 = vadd.f32 %v560, %v704
    %v706 = vpop.f32.mrf.mxu0
    %707 = vmatprep.mubr.bf16.mxu0 0
    %708 = vmatmul.mubr.bf16.gmra.mxu0 %v343
    %v709 = vpop.f32.mrf.mxu0
    %v710 = vadd.f32 %v565, %v709
    %v711 = vpop.f32.mrf.mxu0
    %v712 = vpop.f32.mrf.mxu0
    %v713 = vadd.f32 %v568, %v712
    %v714 = vpop.f32.mrf.mxu0
    %715 = vmatprep.mubr.bf16.mxu0 0
    %716 = vmatmul.mubr.bf16.gmra.mxu0 %v344
    %v717 = vpop.f32.mrf.mxu0
    %v718 = vadd.f32 %v573, %v717
    %v719 = vpop.f32.mrf.mxu0
    %v720 = vpop.f32.mrf.mxu0
    %v721 = vadd.f32 %v576, %v720
    %v722 = vpop.f32.mrf.mxu0
    %723 = vmatprep.mubr.bf16.mxu0 0
    %724 = vmatmul.mubr.bf16.gmra.mxu0 %v345
    %v725 = vpop.f32.mrf.mxu0
    %v726 = vadd.f32 %v581, %v725
    %v727 = vpop.f32.mrf.mxu0
    %v728 = vpop.f32.mrf.mxu0
    %v729 = vadd.f32 %v584, %v728
    %v730 = vpop.f32.mrf.mxu0
    %731 = vdwg.mxu0
    %v732 = vld [vmem:[%s5] sm:$0x1]
    %v734 = vlaneseq
    %v735 = vshrl.u32 %v734, 7
    %v736 = vsub.s32 0, %v735
    %v737 = vrot.slane %v732, %v736
    %v739 = vadd.f32 %v670, %v737
    %v740 = vadd.f32 %v673, %v737
    %v741 = vadd.f32 %v678, %v737
    %v742 = vadd.f32 %v681, %v737
    %v743 = vadd.f32 %v686, %v737
    %v744 = vadd.f32 %v689, %v737
    %v745 = vadd.f32 %v694, %v737
    %v746 = vadd.f32 %v697, %v737
    %v747 = vadd.f32 %v702, %v737
    %v748 = vadd.f32 %v705, %v737
    %v749 = vadd.f32 %v710, %v737
    %v750 = vadd.f32 %v713, %v737
    %v751 = vadd.f32 %v718, %v737
    %v752 = vadd.f32 %v721, %v737
    %v753 = vadd.f32 %v726, %v737
    %v754 = vadd.f32 %v729, %v737
    %v755 = vlaneseq
    %v756 = vand.u32 %v755, 127
    %v757 = vlaneseq
    %v758 = vshrl.u32 %v757, 7
    %v759 = vadd.s32 %v758, 8
    %v760 = vadd.s32 %v758, 16
    %v761 = vadd.s32 %v758, 24
    %v762 = vadd.s32 %v758, 32
    %v763 = vadd.s32 %v758, 40
    %v764 = vadd.s32 %v758, 48
    %v765 = vadd.s32 %v758, 56
    %v766 = vadd.s32 %v758, 64
    %v767 = vadd.s32 %v758, 72
    %v768 = vadd.s32 %v758, 80
    %v769 = vadd.s32 %v758, 88
    %v770 = vadd.s32 %v758, 96
    %v771 = vadd.s32 %v758, 104
    %v772 = vadd.s32 %v758, 112
    %v773 = vadd.s32 %v758, 120
    %s774 = smul.u32 0, 128
    %v775 = vstv %s774
    %v776 = vadd.s32 %v758, %v775
    %v777 = vadd.s32 %v759, %v775
    %v778 = vadd.s32 %v760, %v775
    %v779 = vadd.s32 %v761, %v775
    %v780 = vadd.s32 %v762, %v775
    %v781 = vadd.s32 %v763, %v775
    %v782 = vadd.s32 %v764, %v775
    %v783 = vadd.s32 %v765, %v775
    %v784 = vadd.s32 %v766, %v775
    %v785 = vadd.s32 %v767, %v775
    %v786 = vadd.s32 %v768, %v775
    %v787 = vadd.s32 %v769, %v775
    %v788 = vadd.s32 %v770, %v775
    %v789 = vadd.s32 %v771, %v775
    %v790 = vadd.s32 %v772, %v775
    %v791 = vadd.s32 %v773, %v775
    %vm792 = vcmp.lt.s32.totalorder %v756, 8
    %vm793 = vcmp.lt.s32.totalorder %v776, 16
    %vm794 = vcmp.lt.s32.totalorder %v777, 16
    %vm795 = vcmp.lt.s32.totalorder %v778, 16
    %vm796 = vcmp.lt.s32.totalorder %v779, 16
    %vm797 = vcmp.lt.s32.totalorder %v780, 16
    %vm798 = vcmp.lt.s32.totalorder %v781, 16
    %vm799 = vcmp.lt.s32.totalorder %v782, 16
    %vm800 = vcmp.lt.s32.totalorder %v783, 16
    %vm801 = vcmp.lt.s32.totalorder %v784, 16
    %vm802 = vcmp.lt.s32.totalorder %v785, 16
    %vm803 = vcmp.lt.s32.totalorder %v786, 16
    %vm804 = vcmp.lt.s32.totalorder %v787, 16
    %vm805 = vcmp.lt.s32.totalorder %v788, 16
    %vm806 = vcmp.lt.s32.totalorder %v789, 16
    %vm807 = vcmp.lt.s32.totalorder %v790, 16
    %vm808 = vcmp.lt.s32.totalorder %v791, 16
    %v809 = vsel %vm792, %v739, -1e+30
    %v810 = vsel %vm792, %v740, -1e+30
    %v811 = vsel %vm792, %v741, -1e+30
    %v812 = vsel %vm792, %v742, -1e+30
    %v813 = vsel %vm792, %v743, -1e+30
    %v814 = vsel %vm792, %v744, -1e+30
    %v815 = vsel %vm792, %v745, -1e+30
    %v816 = vsel %vm792, %v746, -1e+30
    %v817 = vsel %vm792, %v747, -1e+30
    %v818 = vsel %vm792, %v748, -1e+30
    %v819 = vsel %vm792, %v749, -1e+30
    %v820 = vsel %vm792, %v750, -1e+30
    %v821 = vsel %vm792, %v751, -1e+30
    %v822 = vsel %vm792, %v752, -1e+30
    %v823 = vsel %vm792, %v753, -1e+30
    %v824 = vsel %vm792, %v754, -1e+30
    %825 = vmax.xlane.f32.xlu0 %v809
    %v826 = vpop.xlane.xlu0 %825
    %827 = vmax.xlane.f32.xlu0 %v810
    %v828 = vpop.xlane.xlu0 %827
    %829 = vmax.xlane.f32.xlu0 %v811
    %v830 = vpop.xlane.xlu0 %829
    %831 = vmax.xlane.f32.xlu0 %v812
    %v832 = vpop.xlane.xlu0 %831
    %833 = vmax.xlane.f32.xlu0 %v813
    %v834 = vpop.xlane.xlu0 %833
    %835 = vmax.xlane.f32.xlu0 %v814
    %v836 = vpop.xlane.xlu0 %835
    %837 = vmax.xlane.f32.xlu0 %v815
    %v838 = vpop.xlane.xlu0 %837
    %839 = vmax.xlane.f32.xlu0 %v816
    %v840 = vpop.xlane.xlu0 %839
    %841 = vmax.xlane.f32.xlu0 %v817
    %v842 = vpop.xlane.xlu0 %841
    %843 = vmax.xlane.f32.xlu0 %v818
    %v844 = vpop.xlane.xlu0 %843
    %845 = vmax.xlane.f32.xlu0 %v819
    %v846 = vpop.xlane.xlu0 %845
    %847 = vmax.xlane.f32.xlu0 %v820
    %v848 = vpop.xlane.xlu0 %847
    %849 = vmax.xlane.f32.xlu0 %v821
    %v850 = vpop.xlane.xlu0 %849
    %851 = vmax.xlane.f32.xlu0 %v822
    %v852 = vpop.xlane.xlu0 %851
    %853 = vmax.xlane.f32.xlu0 %v823
    %v854 = vpop.xlane.xlu0 %853
    %855 = vmax.xlane.f32.xlu0 %v824
    %v856 = vpop.xlane.xlu0 %855
    %v857 = vsub.f32 %v809, %v826
    %v858 = vsub.f32 %v810, %v828
    %v859 = vsub.f32 %v811, %v830
    %v860 = vsub.f32 %v812, %v832
    %v861 = vsub.f32 %v813, %v834
    %v862 = vsub.f32 %v814, %v836
    %v863 = vsub.f32 %v815, %v838
    %v864 = vsub.f32 %v816, %v840
    %v865 = vsub.f32 %v817, %v842
    %v866 = vsub.f32 %v818, %v844
    %v867 = vsub.f32 %v819, %v846
    %v868 = vsub.f32 %v820, %v848
    %v869 = vsub.f32 %v821, %v850
    %v870 = vsub.f32 %v822, %v852
    %v871 = vsub.f32 %v823, %v854
    %v872 = vsub.f32 %v824, %v856
    %v873 = vmul.f32 %v857, 1.442695
    %v874 = vpow.pop %v873
    %v875 = vmul.f32 %v858, 1.442695
    %v876 = vpow.pop %v875
    %v877 = vmul.f32 %v859, 1.442695
    %v878 = vpow.pop %v877
    %v879 = vmul.f32 %v860, 1.442695
    %v880 = vpow.pop %v879
    %v881 = vmul.f32 %v861, 1.442695
    %v882 = vpow.pop %v881
    %v883 = vmul.f32 %v862, 1.442695
    %v884 = vpow.pop %v883
    %v885 = vmul.f32 %v863, 1.442695
    %v886 = vpow.pop %v885
    %v887 = vmul.f32 %v864, 1.442695
    %v888 = vpow.pop %v887
    %v889 = vmul.f32 %v865, 1.442695
    %v890 = vpow.pop %v889
    %v891 = vmul.f32 %v866, 1.442695
    %v892 = vpow.pop %v891
    %v893 = vmul.f32 %v867, 1.442695
    %v894 = vpow.pop %v893
    %v895 = vmul.f32 %v868, 1.442695
    %v896 = vpow.pop %v895
    %v897 = vmul.f32 %v869, 1.442695
    %v898 = vpow.pop %v897
    %v899 = vmul.f32 %v870, 1.442695
    %v900 = vpow.pop %v899
    %v901 = vmul.f32 %v871, 1.442695
    %v902 = vpow.pop %v901
    %v903 = vmul.f32 %v872, 1.442695
    %v904 = vpow.pop %v903
    %905 = vadd.xlane.f32.xlu0 %v874
    %v906 = vpop.xlane.xlu0 %905
    %907 = vadd.xlane.f32.xlu0 %v876
    %v908 = vpop.xlane.xlu0 %907
    %909 = vadd.xlane.f32.xlu0 %v878
    %v910 = vpop.xlane.xlu0 %909
    %911 = vadd.xlane.f32.xlu0 %v880
    %v912 = vpop.xlane.xlu0 %911
    %913 = vadd.xlane.f32.xlu0 %v882
    %v914 = vpop.xlane.xlu0 %913
    %915 = vadd.xlane.f32.xlu0 %v884
    %v916 = vpop.xlane.xlu0 %915
    %917 = vadd.xlane.f32.xlu0 %v886
    %v918 = vpop.xlane.xlu0 %917
    %919 = vadd.xlane.f32.xlu0 %v888
    %v920 = vpop.xlane.xlu0 %919
    %921 = vadd.xlane.f32.xlu0 %v890
    %v922 = vpop.xlane.xlu0 %921
    %923 = vadd.xlane.f32.xlu0 %v892
    %v924 = vpop.xlane.xlu0 %923
    %925 = vadd.xlane.f32.xlu0 %v894
    %v926 = vpop.xlane.xlu0 %925
    %927 = vadd.xlane.f32.xlu0 %v896
    %v928 = vpop.xlane.xlu0 %927
    %929 = vadd.xlane.f32.xlu0 %v898
    %v930 = vpop.xlane.xlu0 %929
    %931 = vadd.xlane.f32.xlu0 %v900
    %v932 = vpop.xlane.xlu0 %931
    %933 = vadd.xlane.f32.xlu0 %v902
    %v934 = vpop.xlane.xlu0 %933
    %935 = vadd.xlane.f32.xlu0 %v904
    %v936 = vpop.xlane.xlu0 %935
    %v937 = vlog2.pop %v906
    %v938 = vmul.f32 %v937, 0.6931472
    %v939 = vlog2.pop %v908
    %v940 = vmul.f32 %v939, 0.6931472
    %v941 = vlog2.pop %v910
    %v942 = vmul.f32 %v941, 0.6931472
    %v943 = vlog2.pop %v912
    %v944 = vmul.f32 %v943, 0.6931472
    %v945 = vlog2.pop %v914
    %v946 = vmul.f32 %v945, 0.6931472
    %v947 = vlog2.pop %v916
    %v948 = vmul.f32 %v947, 0.6931472
    %v949 = vlog2.pop %v918
    %v950 = vmul.f32 %v949, 0.6931472
    %v951 = vlog2.pop %v920
    %v952 = vmul.f32 %v951, 0.6931472
    %v953 = vlog2.pop %v922
    %v954 = vmul.f32 %v953, 0.6931472
    %v955 = vlog2.pop %v924
    %v956 = vmul.f32 %v955, 0.6931472
    %v957 = vlog2.pop %v926
    %v958 = vmul.f32 %v957, 0.6931472
    %v959 = vlog2.pop %v928
    %v960 = vmul.f32 %v959, 0.6931472
    %v961 = vlog2.pop %v930
    %v962 = vmul.f32 %v961, 0.6931472
    %v963 = vlog2.pop %v932
    %v964 = vmul.f32 %v963, 0.6931472
    %v965 = vlog2.pop %v934
    %v966 = vmul.f32 %v965, 0.6931472
    %v967 = vlog2.pop %v936
    %v968 = vmul.f32 %v967, 0.6931472
    %v969 = vsub.f32 %v857, %v938
    %v970 = vsub.f32 %v858, %v940
    %v971 = vsub.f32 %v859, %v942
    %v972 = vsub.f32 %v860, %v944
    %v973 = vsub.f32 %v861, %v946
    %v974 = vsub.f32 %v862, %v948
    %v975 = vsub.f32 %v863, %v950
    %v976 = vsub.f32 %v864, %v952
    %v977 = vsub.f32 %v865, %v954
    %v978 = vsub.f32 %v866, %v956
    %v979 = vsub.f32 %v867, %v958
    %v980 = vsub.f32 %v868, %v960
    %v981 = vsub.f32 %v869, %v962
    %v982 = vsub.f32 %v870, %v964
    %v983 = vsub.f32 %v871, %v966
    %v984 = vsub.f32 %v872, %v968
    %985 = vst [vmem:[%s6] sm:$0xff] %v969
    %986 = vst [vmem:[%s6 + $0x8] sm:$0xff] %v970
    %987 = vst [vmem:[%s6 + $0x10] sm:$0xff] %v971
    %988 = vst [vmem:[%s6 + $0x18] sm:$0xff] %v972
    %989 = vst [vmem:[%s6 + $0x20] sm:$0xff] %v973
    %990 = vst [vmem:[%s6 + $0x28] sm:$0xff] %v974
    %991 = vst [vmem:[%s6 + $0x30] sm:$0xff] %v975
    %992 = vst [vmem:[%s6 + $0x38] sm:$0xff] %v976
    %993 = vst [vmem:[%s6 + $0x40] sm:$0xff] %v977
    %994 = vst [vmem:[%s6 + $0x48] sm:$0xff] %v978
    %995 = vst [vmem:[%s6 + $0x50] sm:$0xff] %v979
    %996 = vst [vmem:[%s6 + $0x58] sm:$0xff] %v980
    %997 = vst [vmem:[%s6 + $0x60] sm:$0xff] %v981
    %998 = vst [vmem:[%s6 + $0x68] sm:$0xff] %v982
    %999 = vst [vmem:[%s6 + $0x70] sm:$0xff] %v983
    %1000 = vst [vmem:[%s6 + $0x78] sm:$0xff] %v984
    %vm1001 = vmand %vm792, %vm793
    %vm1002 = vmand %vm792, %vm794
    %vm1003 = vmand %vm792, %vm795
    %vm1004 = vmand %vm792, %vm796
    %vm1005 = vmand %vm792, %vm797
    %vm1006 = vmand %vm792, %vm798
    %vm1007 = vmand %vm792, %vm799
    %vm1008 = vmand %vm792, %vm800
    %vm1009 = vmand %vm792, %vm801
    %vm1010 = vmand %vm792, %vm802
    %vm1011 = vmand %vm792, %vm803
    %vm1012 = vmand %vm792, %vm804
    %vm1013 = vmand %vm792, %vm805
    %vm1014 = vmand %vm792, %vm806
    %vm1015 = vmand %vm792, %vm807
    %vm1016 = vmand %vm792, %vm808
    %v1017 = vsel %vm1001, %v739, 0.0
    %v1018 = vsel %vm1002, %v740, 0.0
    %v1019 = vsel %vm1003, %v741, 0.0
    %v1020 = vsel %vm1004, %v742, 0.0
    %v1021 = vsel %vm1005, %v743, 0.0
    %v1022 = vsel %vm1006, %v744, 0.0
    %v1023 = vsel %vm1007, %v745, 0.0
    %v1024 = vsel %vm1008, %v746, 0.0
    %v1025 = vsel %vm1009, %v747, 0.0
    %v1026 = vsel %vm1010, %v748, 0.0
    %v1027 = vsel %vm1011, %v749, 0.0
    %v1028 = vsel %vm1012, %v750, 0.0
    %v1029 = vsel %vm1013, %v751, 0.0
    %v1030 = vsel %vm1014, %v752, 0.0
    %v1031 = vsel %vm1015, %v753, 0.0
    %v1032 = vsel %vm1016, %v754, 0.0
    %v1033 = vadd.f32 %v1017, %v1018
    %v1034 = vadd.f32 %v1033, %v1019
    %v1035 = vadd.f32 %v1034, %v1020
    %v1036 = vadd.f32 %v1035, %v1021
    %v1037 = vadd.f32 %v1036, %v1022
    %v1038 = vadd.f32 %v1037, %v1023
    %v1039 = vadd.f32 %v1038, %v1024
    %v1040 = vadd.f32 %v1039, %v1025
    %v1041 = vadd.f32 %v1040, %v1026
    %v1042 = vadd.f32 %v1041, %v1027
    %v1043 = vadd.f32 %v1042, %v1028
    %v1044 = vadd.f32 %v1043, %v1029
    %v1045 = vadd.f32 %v1044, %v1030
    %v1046 = vadd.f32 %v1045, %v1031
    %v1047 = vadd.f32 %v1046, %v1032
    %1048 = vadd.xlane.f32.xlu0 %v1047
    %v1049 = vpop.xlane.xlu0 %1048
    %v1050 = vrot.slane %v1049, 4
    %v1051 = vadd.f32 %v1049, %v1050
    %v1052 = vrot.slane %v1051, 2
    %v1053 = vadd.f32 %v1051, %v1052
    %v1054 = vrot.slane %v1053, 1
    %v1055 = vadd.f32 %v1053, %v1054
    %s1056 = vtos %v1055
    %v1057 = vmul.f32 %v1017, %v1017
    %v1058 = vmul.f32 %v1018, %v1018
    %v1059 = vmul.f32 %v1019, %v1019
    %v1060 = vmul.f32 %v1020, %v1020
    %v1061 = vmul.f32 %v1021, %v1021
    %v1062 = vmul.f32 %v1022, %v1022
    %v1063 = vmul.f32 %v1023, %v1023
    %v1064 = vmul.f32 %v1024, %v1024
    %v1065 = vmul.f32 %v1025, %v1025
    %v1066 = vmul.f32 %v1026, %v1026
    %v1067 = vmul.f32 %v1027, %v1027
    %v1068 = vmul.f32 %v1028, %v1028
    %v1069 = vmul.f32 %v1029, %v1029
    %v1070 = vmul.f32 %v1030, %v1030
    %v1071 = vmul.f32 %v1031, %v1031
    %v1072 = vmul.f32 %v1032, %v1032
    %v1073 = vadd.f32 %v1057, %v1058
    %v1074 = vadd.f32 %v1073, %v1059
    %v1075 = vadd.f32 %v1074, %v1060
    %v1076 = vadd.f32 %v1075, %v1061
    %v1077 = vadd.f32 %v1076, %v1062
    %v1078 = vadd.f32 %v1077, %v1063
    %v1079 = vadd.f32 %v1078, %v1064
    %v1080 = vadd.f32 %v1079, %v1065
    %v1081 = vadd.f32 %v1080, %v1066
    %v1082 = vadd.f32 %v1081, %v1067
    %v1083 = vadd.f32 %v1082, %v1068
    %v1084 = vadd.f32 %v1083, %v1069
    %v1085 = vadd.f32 %v1084, %v1070
    %v1086 = vadd.f32 %v1085, %v1071
    %v1087 = vadd.f32 %v1086, %v1072
    %1088 = vadd.xlane.f32.xlu0 %v1087
    %v1089 = vpop.xlane.xlu0 %1088
    %v1090 = vrot.slane %v1089, 4
    %v1091 = vadd.f32 %v1089, %v1090
    %v1092 = vrot.slane %v1091, 2
    %v1093 = vadd.f32 %v1091, %v1092
    %v1094 = vrot.slane %v1093, 1
    %v1095 = vadd.f32 %v1093, %v1094
    %s1096 = vtos %v1095
    %vm1097 = vcmp.eq.s32.totalorder %v758, 0
    %vm1098 = vcmp.eq.s32.totalorder %v756, 0
    %vm1099 = vmand %vm1097, %vm1098
    %vm1100 = vcmp.eq.s32.totalorder %v756, 1
    %vm1101 = vmand %vm1097, %vm1100
    %v1102 = vstv %s1096
    %v1103 = vsel %vm1101, %v1102, 0.0
    %v1104 = vstv %s1056
    %v1105 = vsel %vm1099, %v1104, %v1103
    %1106 = vst [vmem:[%s7] sm:$0xff] %v1105
  $region33: #{sageweight_forward.3} parent=0 // pred_fallthru
    _
  // Predicated region
  $region34: #{sageweight_forward.3} parent=0 // pred_check
    _
  $region35: #{sageweight_forward.3} parent=0 // pred_check_branch
    %1108 = sbr.rel (0) target = $region37
  $region36: #{sageweight_forward.3} parent=0 // pred_region
    _
  $region37: #{sageweight_forward.3} parent=0 // pred_fallthru
    _
  // Predicated region
  $region38: #{sageweight_forward.3} parent=0 // pred_check
    _
  $region39: #{sageweight_forward.3} parent=0 // pred_check_branch
    %1110 = sbr.rel (0) target = $region41
  $region40: #{sageweight_forward.3} parent=0 // pred_region
    _
  $region41: #{sageweight_forward.3} parent=0 // pred_fallthru
    _
  // Predicated region
  $region42: #{sageweight_forward.3} parent=0 // pred_check
    _
  $region43: #{sageweight_forward.3} parent=0 // pred_check_branch
    %1112 = sbr.rel (0) target = $region45
  $region44: #{sageweight_forward.3} parent=0 // pred_region
    _
  $region45: #{sageweight_forward.3} parent=0 // pred_fallthru
    _
  // Predicated region
  $region46: #{sageweight_forward.3} parent=0 // pred_check
    _
  $region47: #{sageweight_forward.3} parent=0 // pred_check_branch
    %1114 = sbr.rel (0) target = $region49
  $region48: #{sageweight_forward.3} parent=0 // pred_region
    _
  $region49: #{sageweight_forward.3} parent=0 // pred_fallthru
    _

</llo_original>
